<compile_context>
chip_gen: v7x
topology: tpu7x:2x2x1
jax: 0.10.0
libtpu: 0.0.40
codegen_flags: <defaults>
</compile_context>

<pallas_src>
import numpy as np
import jax
import jax.numpy as jnp
from jax.experimental import pallas as pl
from jax.experimental.pallas import tpu as pltpu


# ---------------------------------------------------------------------------
# Host-side (trace-time) operator construction
# ---------------------------------------------------------------------------
def _pool_matrix(n):
    """1-D operator of AvgPool2d(3,1,1) along one axis (count_include_pad)."""
    P = np.zeros((n, n), dtype=np.float32)
    for i in range(n):
        for j in range(max(0, i - 1), min(n, i + 2)):
            P[i, j] = 1.0 / 3.0
    return P


def _interp_matrix(out_size, in_size):
    """1-D operator of F.interpolate(mode='bilinear', align_corners=False)."""
    A = np.zeros((out_size, in_size), dtype=np.float32)
    if in_size == out_size:
        np.fill_diagonal(A, 1.0)
        return A
    scale = in_size / out_size
    for y in range(out_size):
        src = max((y + 0.5) * scale - 0.5, 0.0)
        i0 = min(int(np.floor(src)), in_size - 1)
        i1 = min(i0 + 1, in_size - 1)
        frac = src - i0
        A[y, i0] += 1.0 - frac
        A[y, i1] += frac
    return A


def _round_up(x, m):
    return ((x + m - 1) // m) * m


def _pick_row_tile(n, cap=256):
    """Largest multiple-of-8 divisor of n that is <= cap and leaves >=2 tiles."""
    hi = min(cap, n)
    if n >= 16:
        hi = min(hi, n // 2)
    hi -= hi % 8
    for t in range(hi, 7, -8):
        if n % t == 0:
            return t
    # No sublane-friendly divisor: fall back to a single block.
    # TODO(synk): pad hw0 / mask the tail tile instead of degrading here.
    return n


def _vmem_limit_bytes():
    """Per-generation VMEM ceiling with headroom under physical capacity."""
    try:
        cap = pltpu.get_tpu_info().vmem_capacity_bytes
        return int(min(max(cap - (16 << 20), 32 << 20), 96 << 20))
    except Exception:  # pragma: no cover - conservative fallback
        return 32 << 20


# ---------------------------------------------------------------------------
# Kernels
# ---------------------------------------------------------------------------
def _make_fused_kernel(nf):
    """Fused pool+resize+concat+linear for one (batch, row-tile) grid step.

    refs = (x_0..x_{nf-1}, m_0..m_{nf-1}, w, y_out, stats_out)
      x_f   : (1, hw_f, C_f)      raw feature, channels-last flatten (full map)
      m_f   : (TM, hw_f)          row slice of the pooled+resized operator
      w     : (h_total, o_pad)    lane-padded Linear weight
      y_out : (1, TM, o_pad)      pre-BN linear output rows for this tile
      stats : (1, 1, 2, o_pad)    row0 = partial col sums, row1 = partial sumsq
    """

    def kernel(*refs):
        xs = refs[:nf]
        ms = refs[nf:2 * nf]
        w_ref = refs[2 * nf]
        y_ref = refs[2 * nf + 1]
        stats_ref = refs[2 * nf + 2]

        # M-first contraction (cheapest for a TM-row tile), then one
        # K = h_total matmul against the full padded Linear weight.
        parts = [
            jnp.dot(m_ref[...], x_ref[0], preferred_element_type=jnp.float32)
            for x_ref, m_ref in zip(xs, ms)
        ]
        t = parts[0] if nf == 1 else jnp.concatenate(parts, axis=1)  # (TM, h_total)
        y = jnp.dot(t, w_ref[...], preferred_element_type=jnp.float32)  # (TM, o_pad)
        y_ref[0] = y

        # Per-tile partial BatchNorm statistics; summed by a tiny XLA reduce.
        stats_ref[0, 0, 0:1, :] = jnp.sum(y, axis=0, keepdims=True)
        stats_ref[0, 0, 1:2, :] = jnp.sum(y * y, axis=0, keepdims=True)

    return kernel


def _bn_apply_kernel(y_ref, scale_ref, shift_ref, o_ref):
    """out = y[:, :out_dims] * scale + shift (BN affine fused with un-pad)."""
    od = o_ref.shape[-1]
    o_ref[...] = (y_ref[:, :od] * scale_ref[...] + shift_ref[...]).astype(o_ref.dtype)


# ---------------------------------------------------------------------------
# pallas_call wrappers
# ---------------------------------------------------------------------------
def fused_pool_resize_linear(xs, m_mats, w_pad, hw0, o_pad, row_tile):
    B = xs[0].shape[0]
    nf = len(xs)
    nj = hw0 // row_tile

    in_specs = []
    for x in xs:
        # Full (small) raw feature per batch element; block index constant in j,
        # so consecutive row tiles of the same batch re-use the resident copy.
        in_specs.append(pl.BlockSpec((1,) + x.shape[1:], lambda b, j: (b, 0, 0)))
    for m in m_mats:
        # Only a (row_tile, hw_f) slice of the spatial operator per grid step.
        in_specs.append(pl.BlockSpec((row_tile, m.shape[1]), lambda b, j: (j, 0)))
    in_specs.append(pl.BlockSpec(w_pad.shape, lambda b, j: (0, 0)))
    # TODO(synk): on v5e, if DMA is exposed, set pipeline_mode=pl.Buffered(3)
    # on the streamed M slices or grow row_tile.

    out_specs = [
        pl.BlockSpec((1, row_tile, o_pad), lambda b, j: (b, j, 0)),
        pl.BlockSpec((1, 1, 2, o_pad), lambda b, j: (b, j, 0, 0)),
    ]
    out_shape = [
        jax.ShapeDtypeStruct((B, hw0, o_pad), jnp.float32),
        jax.ShapeDtypeStruct((B, nj, 2, o_pad), jnp.float32),
    ]

    return pl.pallas_call(
        _make_fused_kernel(nf),
        grid=(B, nj),
        in_specs=in_specs,
        out_specs=out_specs,
        out_shape=out_shape,
        compiler_params=pltpu.CompilerParams(
            dimension_semantics=("parallel", "parallel"),
            vmem_limit_bytes=_vmem_limit_bytes(),
        ),
    )(*xs, *m_mats, w_pad)


def bn_apply(y2d, scale, shift, out_dims, row_tile=512):
    """Tiled BN affine that writes the un-padded (N, out_dims) result directly."""
    N, o_pad = y2d.shape
    tile = min(row_tile, _round_up(N, 8))
    return pl.pallas_call(
        _bn_apply_kernel,
        grid=(pl.cdiv(N, tile),),
        in_specs=[
            pl.BlockSpec((tile, o_pad), lambda i: (i, 0)),
            pl.BlockSpec((1, out_dims), lambda i: (0, 0)),
            pl.BlockSpec((1, out_dims), lambda i: (0, 0)),
        ],
        out_specs=pl.BlockSpec((tile, out_dims), lambda i: (i, 0)),
        out_shape=jax.ShapeDtypeStruct((N, out_dims), jnp.float32),
        compiler_params=pltpu.CompilerParams(
            dimension_semantics=("parallel",),
            vmem_limit_bytes=_vmem_limit_bytes(),
        ),
    )(y2d, scale, shift)


# ---------------------------------------------------------------------------
# Forward pass
# ---------------------------------------------------------------------------
def adaptor_forward(feats_nchw, w_lin, b_lin, gamma, beta, out_dims):
    """feats_nchw: list of NCHW arrays; returns (BS*H0*W0, out_dims) float32.

    Matches Adaptor(operation='linear').forward right after __init__
    (BatchNorm1d in training mode: batch mean, biased variance, eps=1e-5).
    `b_lin` is accepted for interface fidelity but never used: a constant
    per-column shift is an exact no-op under training-mode BatchNorm, so
    dropping it saves an operand DMA and a VPU add per grid step.
    """
    del b_lin
    B, _, H0, W0 = feats_nchw[0].shape
    hw0 = H0 * W0
    # TODO(synk): pad to multiples of 256 on v6e/v7x when out_dims > 128.
    o_pad = max(128, _round_up(out_dims, 128))

    xs, m_mats, chans = [], [], []
    for f in feats_nchw:
        f = f.astype(jnp.float32)
        _, C, h, w = f.shape
        R = _interp_matrix(H0, h) @ _pool_matrix(h)    # (H0, h)
        Cm = _interp_matrix(W0, w) @ _pool_matrix(w)   # (W0, w)
        # TODO(synk): replace the dense kron by separable in-kernel application
        # of R / Cm for production-size feature maps (FLOP + HBM win on v7x).
        m_mats.append(jnp.asarray(np.kron(R, Cm)))     # (hw0, h*w)
        xs.append(f.transpose(0, 2, 3, 1).reshape(B, h * w, C))  # channels-last
        chans.append(C)

    h_total = sum(chans)
    assert h_total == w_lin.shape[0]

    # Lane-pad the Linear weight; padded output columns stay exactly zero.
    # TODO(synk): optionally cast X / W to bf16 (f32 accumulate) on v6e/v7x,
    # gated behind a tolerance check; kept f32 so 1/3 pooling and bilinear
    # coefficients remain exact.
    w_pad = jnp.zeros((h_total, o_pad), jnp.float32).at[:, :out_dims].set(
        w_lin.astype(jnp.float32))

    row_tile = _pick_row_tile(hw0)
    if hw0 % row_tile:
        row_tile = hw0

    # Pass 1: fused pool + resize + concat + linear + per-tile BN partials.
    y, stats = fused_pool_resize_linear(xs, m_mats, w_pad, hw0, o_pad, row_tile)

    # Tiny XLA reduction -> training-mode BatchNorm1d scale/shift
    # (batch mean, biased variance, eps=1e-5; running stats are not updated).
    N = B * hw0
    s = jnp.sum(stats, axis=(0, 1))                    # (2, o_pad)
    mean = s[0] / N
    var = jnp.maximum(s[1] / N - mean * mean, 0.0)
    inv = jax.lax.rsqrt(var + 1e-5)
    g = gamma.reshape(1, -1).astype(jnp.float32)
    be = beta.reshape(1, -1).astype(jnp.float32)
    scale = g * inv[:out_dims].reshape(1, -1)                     # (1, out_dims)
    shift = be - mean[:out_dims].reshape(1, -1) * scale           # (1, out_dims)

    # Pass 2: tiled BN affine fused with the un-padding (single HBM pass).
    return bn_apply(y.reshape(N, o_pad), scale, shift, out_dims)


# ---------------------------------------------------------------------------
if __name__ == "__main__":
    key = jax.random.PRNGKey(0)
    k1, k2, k3, k4 = jax.random.split(key, 4)

    # Two hierarchical feature maps, 16 channels each -> h = 32.
    B = 2
    f0 = jax.random.normal(k1, (B, 16, 16, 16), jnp.float32)   # NCHW
    f1 = jax.random.normal(k2, (B, 16, 8, 8), jnp.float32)     # NCHW
    h = 32
    out_dims = 32  # Adaptor default: out_dims = h

    # Deterministic params (xavier-normal Linear weight, small uniform bias,
    # BatchNorm gamma=1 / beta=0 as right after __init__).
    std = (2.0 / (h + out_dims)) ** 0.5
    W_lin = std * jax.random.normal(k3, (h, out_dims), jnp.float32)   # (in, out)
    b_lin = (1.0 / h ** 0.5) * (
        2.0 * jax.random.uniform(k4, (1, out_dims), jnp.float32) - 1.0)
    gamma = jnp.ones((1, out_dims), jnp.float32)
    beta = jnp.zeros((1, out_dims), jnp.float32)

    fwd = jax.jit(adaptor_forward, static_argnums=(5,))
    out = fwd([f0, f1], W_lin, b_lin, gamma, beta, out_dims)
    jax.block_until_ready(out)
    assert out.shape == (B * 16 * 16, out_dims)
    assert bool(jnp.all(jnp.isfinite(out)))
    print("KERNEL_OK")
</pallas_src>

<mosaic_0001>
module attributes {stable_mosaic.version = 11 : i64} {
  func.func @_bn_apply_kernel(%arg0: i32, %arg1: memref<512x128xf32, #tpu.memory_space<vmem>>, %arg2: memref<1x32xf32, #tpu.memory_space<vmem>>, %arg3: memref<1x32xf32, #tpu.memory_space<vmem>>, %arg4: memref<512x32xf32, #tpu.memory_space<vmem>>) attributes {dimension_semantics = [#tpu.dimension_semantics<parallel>], iteration_bounds = array<i64: 1>, scalar_prefetch = 0 : i64, scratch_operands = 0 : i64, tpu.core_type = #tpu.core_type<tc>, window_params = [{transform_indices = @transform_0, window_bounds = array<i64: 512, 128>}, {pipeline_mode = #tpu.pipeline_mode<synchronous>, transform_indices = @transform_1, window_bounds = array<i64: 1, 32>}, {pipeline_mode = #tpu.pipeline_mode<synchronous>, transform_indices = @transform_2, window_bounds = array<i64: 1, 32>}, {transform_indices = @transform_3, window_bounds = array<i64: 512, 32>}]} {
    %c0 = arith.constant 0 : index
    %c0_0 = arith.constant 0 : index
    %0 = vector.load %arg1[%c0, %c0_0] : memref<512x128xf32, #tpu.memory_space<vmem>>, vector<512x32xf32>
    %c0_1 = arith.constant 0 : index
    %c0_2 = arith.constant 0 : index
    %1 = vector.load %arg2[%c0_1, %c0_2] : memref<1x32xf32, #tpu.memory_space<vmem>>, vector<1x32xf32>
    %2 = vector.broadcast %1 : vector<1x32xf32> to vector<512x32xf32>
    %3 = arith.mulf %0, %2 : vector<512x32xf32>
    %c0_3 = arith.constant 0 : index
    %c0_4 = arith.constant 0 : index
    %4 = vector.load %arg3[%c0_3, %c0_4] : memref<1x32xf32, #tpu.memory_space<vmem>>, vector<1x32xf32>
    %5 = vector.broadcast %4 : vector<1x32xf32> to vector<512x32xf32>
    %6 = arith.addf %3, %5 : vector<512x32xf32>
    %c0_5 = arith.constant 0 : index
    %c0_6 = arith.constant 0 : index
    %7 = vector.load %arg4[%c0_5, %c0_6] : memref<512x32xf32, #tpu.memory_space<vmem>>, vector<512x32xf32>
    tpu.vector_store %arg4[%c0_5, %c0_6], %6 {strides = array<i32>} : memref<512x32xf32, #tpu.memory_space<vmem>>, vector<512x32xf32>,
    return
  }
  func.func @transform_0(%arg0: i32) -> (i32, i32) {
    %c0_i32 = arith.constant 0 : i32
    %c0_i32_0 = arith.constant 0 : i32
    return %arg0, %c0_i32 : i32, i32
  }
  func.func @transform_1(%arg0: i32) -> (i32, i32) {
    %c0_i32 = arith.constant 0 : i32
    %c0_i32_0 = arith.constant 0 : i32
    %c0_i32_1 = arith.constant 0 : i32
    return %c0_i32, %c0_i32_0 : i32, i32
  }
  func.func @transform_2(%arg0: i32) -> (i32, i32) {
    %c0_i32 = arith.constant 0 : i32
    %c0_i32_0 = arith.constant 0 : i32
    %c0_i32_1 = arith.constant 0 : i32
    return %c0_i32, %c0_i32_0 : i32, i32
  }
  func.func @transform_3(%arg0: i32) -> (i32, i32) {
    %c0_i32 = arith.constant 0 : i32
    %c0_i32_0 = arith.constant 0 : i32
    return %arg0, %c0_i32 : i32, i32
  }
}

module attributes {stable_mosaic.version = 11 : i64} {
  func.func @kernel(%arg0: i32, %arg1: i32, %arg2: memref<1x256x16xf32, #tpu.memory_space<vmem>>, %arg3: memref<1x64x16xf32, #tpu.memory_space<vmem>>, %arg4: memref<128x256xf32, #tpu.memory_space<vmem>>, %arg5: memref<128x64xf32, #tpu.memory_space<vmem>>, %arg6: memref<32x128xf32, #tpu.memory_space<vmem>>, %arg7: memref<1x128x128xf32, #tpu.memory_space<vmem>>, %arg8: memref<1x1x2x128xf32, #tpu.memory_space<vmem>>) attributes {dimension_semantics = [#tpu.dimension_semantics<parallel>, #tpu.dimension_semantics<parallel>], iteration_bounds = array<i64: 2, 2>, scalar_prefetch = 0 : i64, scratch_operands = 0 : i64, tpu.core_type = #tpu.core_type<tc>, window_params = [{transform_indices = @transform_0, window_bounds = array<i64: 1, 256, 16>}, {transform_indices = @transform_1, window_bounds = array<i64: 1, 64, 16>}, {transform_indices = @transform_2, window_bounds = array<i64: 128, 256>}, {transform_indices = @transform_3, window_bounds = array<i64: 128, 64>}, {pipeline_mode = #tpu.pipeline_mode<synchronous>, transform_indices = @transform_4, window_bounds = array<i64: 32, 128>}, {transform_indices = @transform_5, window_bounds = array<i64: 1, 128, 128>}, {transform_indices = @transform_6, window_bounds = array<i64: 1, 1, 2, 128>}]} {
    %c0 = arith.constant 0 : index
    %c0_0 = arith.constant 0 : index
    %0 = vector.load %arg4[%c0, %c0_0] : memref<128x256xf32, #tpu.memory_space<vmem>>, vector<128x256xf32>
    %c0_1 = arith.constant 0 : index
    %c0_2 = arith.constant 0 : index
    %c0_3 = arith.constant 0 : index
    %1 = vector.load %arg2[%c0_1, %c0_2, %c0_3] : memref<1x256x16xf32, #tpu.memory_space<vmem>>, vector<1x256x16xf32>
    %2 = vector.shape_cast %1 : vector<1x256x16xf32> to vector<256x16xf32>
    %cst = arith.constant dense<0.000000e+00> : vector<128x16xf32>
    %3 = tpu.matmul %0, %2, %cst {dimension_numbers = #tpu.dot_dimension_numbers<[1], [0], [0], [1], [0, 0, 1, 1], [], []>} : vector<128x256xf32>, vector<256x16xf32>, vector<128x16xf32> -> vector<128x16xf32>
    %c0_4 = arith.constant 0 : index
    %c0_5 = arith.constant 0 : index
    %4 = vector.load %arg5[%c0_4, %c0_5] : memref<128x64xf32, #tpu.memory_space<vmem>>, vector<128x64xf32>
    %c0_6 = arith.constant 0 : index
    %c0_7 = arith.constant 0 : index
    %c0_8 = arith.constant 0 : index
    %5 = vector.load %arg3[%c0_6, %c0_7, %c0_8] : memref<1x64x16xf32, #tpu.memory_space<vmem>>, vector<1x64x16xf32>
    %6 = vector.shape_cast %5 : vector<1x64x16xf32> to vector<64x16xf32>
    %cst_9 = arith.constant dense<0.000000e+00> : vector<128x16xf32>
    %7 = tpu.matmul %4, %6, %cst_9 {dimension_numbers = #tpu.dot_dimension_numbers<[1], [0], [0], [1], [0, 0, 1, 1], [], []>} : vector<128x64xf32>, vector<64x16xf32>, vector<128x16xf32> -> vector<128x16xf32>
    %8 = tpu.concatenate %3, %7 in 1 : vector<128x16xf32>, vector<128x16xf32> -> vector<128x32xf32>
    %c0_10 = arith.constant 0 : index
    %c0_11 = arith.constant 0 : index
    %9 = vector.load %arg6[%c0_10, %c0_11] : memref<32x128xf32, #tpu.memory_space<vmem>>, vector<32x128xf32>
    %cst_12 = arith.constant dense<0.000000e+00> : vector<128x128xf32>
    %10 = tpu.matmul %8, %9, %cst_12 {dimension_numbers = #tpu.dot_dimension_numbers<[1], [0], [0], [1], [0, 0, 1, 1], [], []>} : vector<128x32xf32>, vector<32x128xf32>, vector<128x128xf32> -> vector<128x128xf32>
    %c0_13 = arith.constant 0 : index
    %c0_14 = arith.constant 0 : index
    %c0_15 = arith.constant 0 : index
    %11 = vector.load %arg7[%c0_13, %c0_14, %c0_15] : memref<1x128x128xf32, #tpu.memory_space<vmem>>, vector<1x128x128xf32>
    %12 = vector.shape_cast %11 : vector<1x128x128xf32> to vector<128x128xf32>
    %13 = vector.shape_cast %10 : vector<128x128xf32> to vector<1x128x128xf32>
    tpu.vector_store %arg7[%c0_13, %c0_14, %c0_15], %13 {strides = array<i32>} : memref<1x128x128xf32, #tpu.memory_space<vmem>>, vector<1x128x128xf32>,
    %cst_16 = arith.constant dense<0.000000e+00> : vector<128xf32>
    %14 = vector.multi_reduction <add>, %10, %cst_16 [0] : vector<128x128xf32> to vector<128xf32>
    %15 = vector.shape_cast %14 : vector<128xf32> to vector<1x128xf32>
    %c0_17 = arith.constant 0 : index
    %c0_18 = arith.constant 0 : index
    %c0_19 = arith.constant 0 : index
    %c0_20 = arith.constant 0 : index
    %16 = vector.load %arg8[%c0_17, %c0_18, %c0_19, %c0_20] : memref<1x1x2x128xf32, #tpu.memory_space<vmem>>, vector<1x1x1x128xf32>
    %17 = vector.shape_cast %16 : vector<1x1x1x128xf32> to vector<1x128xf32>
    %18 = vector.shape_cast %15 : vector<1x128xf32> to vector<1x1x1x128xf32>
    tpu.vector_store %arg8[%c0_17, %c0_18, %c0_19, %c0_20], %18 {strides = array<i32>} : memref<1x1x2x128xf32, #tpu.memory_space<vmem>>, vector<1x1x1x128xf32>,
    %19 = arith.mulf %10, %10 : vector<128x128xf32>
    %cst_21 = arith.constant dense<0.000000e+00> : vector<128xf32>
    %20 = vector.multi_reduction <add>, %19, %cst_21 [0] : vector<128x128xf32> to vector<128xf32>
    %21 = vector.shape_cast %20 : vector<128xf32> to vector<1x128xf32>
    %c0_22 = arith.constant 0 : index
    %c0_23 = arith.constant 0 : index
    %c1 = arith.constant 1 : index
    %c0_24 = arith.constant 0 : index
    %22 = vector.load %arg8[%c0_22, %c0_23, %c1, %c0_24] : memref<1x1x2x128xf32, #tpu.memory_space<vmem>>, vector<1x1x1x128xf32>
    %23 = vector.shape_cast %22 : vector<1x1x1x128xf32> to vector<1x128xf32>
    %24 = vector.shape_cast %21 : vector<1x128xf32> to vector<1x1x1x128xf32>
    tpu.vector_store %arg8[%c0_22, %c0_23, %c1, %c0_24], %24 {strides = array<i32>} : memref<1x1x2x128xf32, #tpu.memory_space<vmem>>, vector<1x1x1x128xf32>,
    return
  }
  func.func @transform_0(%arg0: i32, %arg1: i32) -> (i32, i32, i32) {
    %c0_i32 = arith.constant 0 : i32
    %c0_i32_0 = arith.constant 0 : i32
    %c0_i32_1 = arith.constant 0 : i32
    return %arg0, %c0_i32, %c0_i32_0 : i32, i32, i32
  }
  func.func @transform_1(%arg0: i32, %arg1: i32) -> (i32, i32, i32) {
    %c0_i32 = arith.constant 0 : i32
    %c0_i32_0 = arith.constant 0 : i32
    %c0_i32_1 = arith.constant 0 : i32
    return %arg0, %c0_i32, %c0_i32_0 : i32, i32, i32
  }
  func.func @transform_2(%arg0: i32, %arg1: i32) -> (i32, i32) {
    %c0_i32 = arith.constant 0 : i32
    %c0_i32_0 = arith.constant 0 : i32
    return %arg1, %c0_i32 : i32, i32
  }
  func.func @transform_3(%arg0: i32, %arg1: i32) -> (i32, i32) {
    %c0_i32 = arith.constant 0 : i32
    %c0_i32_0 = arith.constant 0 : i32
    return %arg1, %c0_i32 : i32, i32
  }
  func.func @transform_4(%arg0: i32, %arg1: i32) -> (i32, i32) {
    %c0_i32 = arith.constant 0 : i32
    %c0_i32_0 = arith.constant 0 : i32
    %c0_i32_1 = arith.constant 0 : i32
    return %c0_i32, %c0_i32_0 : i32, i32
  }
  func.func @transform_5(%arg0: i32, %arg1: i32) -> (i32, i32, i32) {
    %c0_i32 = arith.constant 0 : i32
    %c0_i32_0 = arith.constant 0 : i32
    return %arg0, %arg1, %c0_i32 : i32, i32, i32
  }
  func.func @transform_6(%arg0: i32, %arg1: i32) -> (i32, i32, i32, i32) {
    %c0_i32 = arith.constant 0 : i32
    %c0_i32_0 = arith.constant 0 : i32
    %c0_i32_1 = arith.constant 0 : i32
    return %arg0, %arg1, %c0_i32, %c0_i32_0 : i32, i32, i32, i32
  }
}

</mosaic_0001>

<llo_original>
// kernel: adaptor_forward.3
$region0: #{adaptor_forward.3}
  #allocation0 [shape = 'u32[]', space=smem, size = 0x4, offset = 0x4, fixed_abs, tag = 'smem constant byte address 0x4 - core index']
  #allocation1 [shape = 'u32[144,128]{1,0:T(1,128)}', space=vmem, size = 0x12000, scoped, tag = 'internal scratch']
  %s0 = inlined_call_operand.vmem [shape: f32[512,128], index: 0, kind: input, shape index: {}]
  %s1 = inlined_call_operand.vmem [shape: f32[1,32], index: 1, kind: input, shape index: {}]
  %s2 = inlined_call_operand.vmem [shape: f32[1,32], index: 2, kind: input, shape index: {}]
  %s3 = inlined_call_operand.vmem [shape: f32[512,32], index: 3, kind: output, shape index: {}]
  %s4 = sld [smem:[#allocation0]]
  $region22: #{adaptor_forward.3} parent=0
    _
  %s6 = ssub.s32 1, %s4
  %s7 = scalar_select 0, %s6, %s4
  // Predicated region
  $region2: #{adaptor_forward.3} parent=0 // pred_check
    _
  $region3: #{adaptor_forward.3} parent=0 // pred_check_branch
    %9 = sbr.rel (0) target = $region5
  $region4: #{adaptor_forward.3} parent=0 // pred_region
    _
  $region5: #{adaptor_forward.3} parent=0 // pred_fallthru
    _
  // Predicated region
  $region6: #{adaptor_forward.3} parent=0 // pred_check
    _
  $region7: #{adaptor_forward.3} parent=0 // pred_check_branch
    %11 = sbr.rel (0) target = $region9
  $region8: #{adaptor_forward.3} parent=0 // pred_region
    _
  $region9: #{adaptor_forward.3} parent=0 // pred_fallthru
    _
  // Predicated region
  $region10: #{adaptor_forward.3} parent=0 // pred_check
    _
  $region11: #{adaptor_forward.3} parent=0 // pred_check_branch
    %13 = sbr.rel (0) target = $region13
  $region12: #{adaptor_forward.3} parent=0 // pred_region
    _
  $region13: #{adaptor_forward.3} parent=0 // pred_fallthru
    _
  %v14 = vld [vmem:[%s0] sm:$0xff]
  %v15 = vld [vmem:[%s0 + $0x8] sm:$0xff]
  %v16 = vld [vmem:[%s0 + $0x10] sm:$0xff]
  %v17 = vld [vmem:[%s0 + $0x18] sm:$0xff]
  %v18 = vld [vmem:[%s0 + $0x20] sm:$0xff]
  %v19 = vld [vmem:[%s0 + $0x28] sm:$0xff]
  %v20 = vld [vmem:[%s0 + $0x30] sm:$0xff]
  %v21 = vld [vmem:[%s0 + $0x38] sm:$0xff]
  %v22 = vld [vmem:[%s0 + $0x40] sm:$0xff]
  %v23 = vld [vmem:[%s0 + $0x48] sm:$0xff]
  %v24 = vld [vmem:[%s0 + $0x50] sm:$0xff]
  %v25 = vld [vmem:[%s0 + $0x58] sm:$0xff]
  %v26 = vld [vmem:[%s0 + $0x60] sm:$0xff]
  %v27 = vld [vmem:[%s0 + $0x68] sm:$0xff]
  %v28 = vld [vmem:[%s0 + $0x70] sm:$0xff]
  %v29 = vld [vmem:[%s0 + $0x78] sm:$0xff]
  %v30 = vld [vmem:[%s0 + $0x80] sm:$0xff]
  %v31 = vld [vmem:[%s0 + $0x88] sm:$0xff]
  %v32 = vld [vmem:[%s0 + $0x90] sm:$0xff]
  %v33 = vld [vmem:[%s0 + $0x98] sm:$0xff]
  %v34 = vld [vmem:[%s0 + $0xa0] sm:$0xff]
  %v35 = vld [vmem:[%s0 + $0xa8] sm:$0xff]
  %v36 = vld [vmem:[%s0 + $0xb0] sm:$0xff]
  %v37 = vld [vmem:[%s0 + $0xb8] sm:$0xff]
  %v38 = vld [vmem:[%s0 + $0xc0] sm:$0xff]
  %v39 = vld [vmem:[%s0 + $0xc8] sm:$0xff]
  %v40 = vld [vmem:[%s0 + $0xd0] sm:$0xff]
  %v41 = vld [vmem:[%s0 + $0xd8] sm:$0xff]
  %v42 = vld [vmem:[%s0 + $0xe0] sm:$0xff]
  %v43 = vld [vmem:[%s0 + $0xe8] sm:$0xff]
  %v44 = vld [vmem:[%s0 + $0xf0] sm:$0xff]
  %v45 = vld [vmem:[%s0 + $0xf8] sm:$0xff]
  %v46 = vld [vmem:[%s0 + $0x100] sm:$0xff]
  %v47 = vld [vmem:[%s0 + $0x108] sm:$0xff]
  %v48 = vld [vmem:[%s0 + $0x110] sm:$0xff]
  %v49 = vld [vmem:[%s0 + $0x118] sm:$0xff]
  %v50 = vld [vmem:[%s0 + $0x120] sm:$0xff]
  %v51 = vld [vmem:[%s0 + $0x128] sm:$0xff]
  %v52 = vld [vmem:[%s0 + $0x130] sm:$0xff]
  %v53 = vld [vmem:[%s0 + $0x138] sm:$0xff]
  %v54 = vld [vmem:[%s0 + $0x140] sm:$0xff]
  %v55 = vld [vmem:[%s0 + $0x148] sm:$0xff]
  %v56 = vld [vmem:[%s0 + $0x150] sm:$0xff]
  %v57 = vld [vmem:[%s0 + $0x158] sm:$0xff]
  %v58 = vld [vmem:[%s0 + $0x160] sm:$0xff]
  %v59 = vld [vmem:[%s0 + $0x168] sm:$0xff]
  %v60 = vld [vmem:[%s0 + $0x170] sm:$0xff]
  %v61 = vld [vmem:[%s0 + $0x178] sm:$0xff]
  %v62 = vld [vmem:[%s0 + $0x180] sm:$0xff]
  %v63 = vld [vmem:[%s0 + $0x188] sm:$0xff]
  %v64 = vld [vmem:[%s0 + $0x190] sm:$0xff]
  %v65 = vld [vmem:[%s0 + $0x198] sm:$0xff]
  %v66 = vld [vmem:[%s0 + $0x1a0] sm:$0xff]
  %v67 = vld [vmem:[%s0 + $0x1a8] sm:$0xff]
  %v68 = vld [vmem:[%s0 + $0x1b0] sm:$0xff]
  %v69 = vld [vmem:[%s0 + $0x1b8] sm:$0xff]
  %v70 = vld [vmem:[%s0 + $0x1c0] sm:$0xff]
  %v71 = vld [vmem:[%s0 + $0x1c8] sm:$0xff]
  %v72 = vld [vmem:[%s0 + $0x1d0] sm:$0xff]
  %v73 = vld [vmem:[%s0 + $0x1d8] sm:$0xff]
  %v74 = vld [vmem:[%s0 + $0x1e0] sm:$0xff]
  %v75 = vld [vmem:[%s0 + $0x1e8] sm:$0xff]
  %v76 = vld [vmem:[%s0 + $0x1f0] sm:$0xff]
  %v77 = vld [vmem:[%s0 + $0x1f8] sm:$0xff]
  %v78 = vld [vmem:[%s1] sm:$0x1]
  %v80 = vlaneseq
  %v81 = vshrl.u32 %v80, 7
  %v82 = vsub.s32 0, %v81
  %v83 = vrot.slane %v78, %v82
  %v85 = vmul.f32 %v14, %v83
  %v86 = vmul.f32 %v15, %v83
  %v87 = vmul.f32 %v16, %v83
  %v88 = vmul.f32 %v17, %v83
  %v89 = vmul.f32 %v18, %v83
  %v90 = vmul.f32 %v19, %v83
  %v91 = vmul.f32 %v20, %v83
  %v92 = vmul.f32 %v21, %v83
  %v93 = vmul.f32 %v22, %v83
  %v94 = vmul.f32 %v23, %v83
  %v95 = vmul.f32 %v24, %v83
  %v96 = vmul.f32 %v25, %v83
  %v97 = vmul.f32 %v26, %v83
  %v98 = vmul.f32 %v27, %v83
  %v99 = vmul.f32 %v28, %v83
  %v100 = vmul.f32 %v29, %v83
  %v101 = vmul.f32 %v30, %v83
  %v102 = vmul.f32 %v31, %v83
  %v103 = vmul.f32 %v32, %v83
  %v104 = vmul.f32 %v33, %v83
  %v105 = vmul.f32 %v34, %v83
  %v106 = vmul.f32 %v35, %v83
  %v107 = vmul.f32 %v36, %v83
  %v108 = vmul.f32 %v37, %v83
  %v109 = vmul.f32 %v38, %v83
  %v110 = vmul.f32 %v39, %v83
  %v111 = vmul.f32 %v40, %v83
  %v112 = vmul.f32 %v41, %v83
  %v113 = vmul.f32 %v42, %v83
  %v114 = vmul.f32 %v43, %v83
  %v115 = vmul.f32 %v44, %v83
  %v116 = vmul.f32 %v45, %v83
  %v117 = vmul.f32 %v46, %v83
  %v118 = vmul.f32 %v47, %v83
  %v119 = vmul.f32 %v48, %v83
  %v120 = vmul.f32 %v49, %v83
  %v121 = vmul.f32 %v50, %v83
  %v122 = vmul.f32 %v51, %v83
  %v123 = vmul.f32 %v52, %v83
  %v124 = vmul.f32 %v53, %v83
  %v125 = vmul.f32 %v54, %v83
  %v126 = vmul.f32 %v55, %v83
  %v127 = vmul.f32 %v56, %v83
  %v128 = vmul.f32 %v57, %v83
  %v129 = vmul.f32 %v58, %v83
  %v130 = vmul.f32 %v59, %v83
  %v131 = vmul.f32 %v60, %v83
  %v132 = vmul.f32 %v61, %v83
  %v133 = vmul.f32 %v62, %v83
  %v134 = vmul.f32 %v63, %v83
  %v135 = vmul.f32 %v64, %v83
  %v136 = vmul.f32 %v65, %v83
  %v137 = vmul.f32 %v66, %v83
  %v138 = vmul.f32 %v67, %v83
  %v139 = vmul.f32 %v68, %v83
  %v140 = vmul.f32 %v69, %v83
  %v141 = vmul.f32 %v70, %v83
  %v142 = vmul.f32 %v71, %v83
  %v143 = vmul.f32 %v72, %v83
  %v144 = vmul.f32 %v73, %v83
  %v145 = vmul.f32 %v74, %v83
  %v146 = vmul.f32 %v75, %v83
  %v147 = vmul.f32 %v76, %v83
  %v148 = vmul.f32 %v77, %v83
  %v149 = vld [vmem:[%s2] sm:$0x1]
  %v151 = vlaneseq
  %v152 = vshrl.u32 %v151, 7
  %v153 = vsub.s32 0, %v152
  %v154 = vrot.slane %v149, %v153
  %v156 = vadd.f32 %v85, %v154
  %v157 = vadd.f32 %v86, %v154
  %v158 = vadd.f32 %v87, %v154
  %v159 = vadd.f32 %v88, %v154
  %v160 = vadd.f32 %v89, %v154
  %v161 = vadd.f32 %v90, %v154
  %v162 = vadd.f32 %v91, %v154
  %v163 = vadd.f32 %v92, %v154
  %v164 = vadd.f32 %v93, %v154
  %v165 = vadd.f32 %v94, %v154
  %v166 = vadd.f32 %v95, %v154
  %v167 = vadd.f32 %v96, %v154
  %v168 = vadd.f32 %v97, %v154
  %v169 = vadd.f32 %v98, %v154
  %v170 = vadd.f32 %v99, %v154
  %v171 = vadd.f32 %v100, %v154
  %v172 = vadd.f32 %v101, %v154
  %v173 = vadd.f32 %v102, %v154
  %v174 = vadd.f32 %v103, %v154
  %v175 = vadd.f32 %v104, %v154
  %v176 = vadd.f32 %v105, %v154
  %v177 = vadd.f32 %v106, %v154
  %v178 = vadd.f32 %v107, %v154
  %v179 = vadd.f32 %v108, %v154
  %v180 = vadd.f32 %v109, %v154
  %v181 = vadd.f32 %v110, %v154
  %v182 = vadd.f32 %v111, %v154
  %v183 = vadd.f32 %v112, %v154
  %v184 = vadd.f32 %v113, %v154
  %v185 = vadd.f32 %v114, %v154
  %v186 = vadd.f32 %v115, %v154
  %v187 = vadd.f32 %v116, %v154
  %v188 = vadd.f32 %v117, %v154
  %v189 = vadd.f32 %v118, %v154
  %v190 = vadd.f32 %v119, %v154
  %v191 = vadd.f32 %v120, %v154
  %v192 = vadd.f32 %v121, %v154
  %v193 = vadd.f32 %v122, %v154
  %v194 = vadd.f32 %v123, %v154
  %v195 = vadd.f32 %v124, %v154
  %v196 = vadd.f32 %v125, %v154
  %v197 = vadd.f32 %v126, %v154
  %v198 = vadd.f32 %v127, %v154
  %v199 = vadd.f32 %v128, %v154
  %v200 = vadd.f32 %v129, %v154
  %v201 = vadd.f32 %v130, %v154
  %v202 = vadd.f32 %v131, %v154
  %v203 = vadd.f32 %v132, %v154
  %v204 = vadd.f32 %v133, %v154
  %v205 = vadd.f32 %v134, %v154
  %v206 = vadd.f32 %v135, %v154
  %v207 = vadd.f32 %v136, %v154
  %v208 = vadd.f32 %v137, %v154
  %v209 = vadd.f32 %v138, %v154
  %v210 = vadd.f32 %v139, %v154
  %v211 = vadd.f32 %v140, %v154
  %v212 = vadd.f32 %v141, %v154
  %v213 = vadd.f32 %v142, %v154
  %v214 = vadd.f32 %v143, %v154
  %v215 = vadd.f32 %v144, %v154
  %v216 = vadd.f32 %v145, %v154
  %v217 = vadd.f32 %v146, %v154
  %v218 = vadd.f32 %v147, %v154
  %v219 = vadd.f32 %v148, %v154
  %vm220 = vcmask 261120
  %221 = vst.msk [vmem:[%s3] sm:$0xff] %vm220, %v156
  %222 = vst.msk [vmem:[%s3 + $0x8] sm:$0xff] %vm220, %v157
  %223 = vst.msk [vmem:[%s3 + $0x10] sm:$0xff] %vm220, %v158
  %224 = vst.msk [vmem:[%s3 + $0x18] sm:$0xff] %vm220, %v159
  %225 = vst.msk [vmem:[%s3 + $0x20] sm:$0xff] %vm220, %v160
  %226 = vst.msk [vmem:[%s3 + $0x28] sm:$0xff] %vm220, %v161
  %227 = vst.msk [vmem:[%s3 + $0x30] sm:$0xff] %vm220, %v162
  %228 = vst.msk [vmem:[%s3 + $0x38] sm:$0xff] %vm220, %v163
  %229 = vst.msk [vmem:[%s3 + $0x40] sm:$0xff] %vm220, %v164
  %230 = vst.msk [vmem:[%s3 + $0x48] sm:$0xff] %vm220, %v165
  %231 = vst.msk [vmem:[%s3 + $0x50] sm:$0xff] %vm220, %v166
  %232 = vst.msk [vmem:[%s3 + $0x58] sm:$0xff] %vm220, %v167
  %233 = vst.msk [vmem:[%s3 + $0x60] sm:$0xff] %vm220, %v168
  %234 = vst.msk [vmem:[%s3 + $0x68] sm:$0xff] %vm220, %v169
  %235 = vst.msk [vmem:[%s3 + $0x70] sm:$0xff] %vm220, %v170
  %236 = vst.msk [vmem:[%s3 + $0x78] sm:$0xff] %vm220, %v171
  %237 = vst.msk [vmem:[%s3 + $0x80] sm:$0xff] %vm220, %v172
  %238 = vst.msk [vmem:[%s3 + $0x88] sm:$0xff] %vm220, %v173
  %239 = vst.msk [vmem:[%s3 + $0x90] sm:$0xff] %vm220, %v174
  %240 = vst.msk [vmem:[%s3 + $0x98] sm:$0xff] %vm220, %v175
  %241 = vst.msk [vmem:[%s3 + $0xa0] sm:$0xff] %vm220, %v176
  %242 = vst.msk [vmem:[%s3 + $0xa8] sm:$0xff] %vm220, %v177
  %243 = vst.msk [vmem:[%s3 + $0xb0] sm:$0xff] %vm220, %v178
  %244 = vst.msk [vmem:[%s3 + $0xb8] sm:$0xff] %vm220, %v179
  %245 = vst.msk [vmem:[%s3 + $0xc0] sm:$0xff] %vm220, %v180
  %246 = vst.msk [vmem:[%s3 + $0xc8] sm:$0xff] %vm220, %v181
  %247 = vst.msk [vmem:[%s3 + $0xd0] sm:$0xff] %vm220, %v182
  %248 = vst.msk [vmem:[%s3 + $0xd8] sm:$0xff] %vm220, %v183
  %249 = vst.msk [vmem:[%s3 + $0xe0] sm:$0xff] %vm220, %v184
  %250 = vst.msk [vmem:[%s3 + $0xe8] sm:$0xff] %vm220, %v185
  %251 = vst.msk [vmem:[%s3 + $0xf0] sm:$0xff] %vm220, %v186
  %252 = vst.msk [vmem:[%s3 + $0xf8] sm:$0xff] %vm220, %v187
  %253 = vst.msk [vmem:[%s3 + $0x100] sm:$0xff] %vm220, %v188
  %254 = vst.msk [vmem:[%s3 + $0x108] sm:$0xff] %vm220, %v189
  %255 = vst.msk [vmem:[%s3 + $0x110] sm:$0xff] %vm220, %v190
  %256 = vst.msk [vmem:[%s3 + $0x118] sm:$0xff] %vm220, %v191
  %257 = vst.msk [vmem:[%s3 + $0x120] sm:$0xff] %vm220, %v192
  %258 = vst.msk [vmem:[%s3 + $0x128] sm:$0xff] %vm220, %v193
  %259 = vst.msk [vmem:[%s3 + $0x130] sm:$0xff] %vm220, %v194
  %260 = vst.msk [vmem:[%s3 + $0x138] sm:$0xff] %vm220, %v195
  %261 = vst.msk [vmem:[%s3 + $0x140] sm:$0xff] %vm220, %v196
  %262 = vst.msk [vmem:[%s3 + $0x148] sm:$0xff] %vm220, %v197
  %263 = vst.msk [vmem:[%s3 + $0x150] sm:$0xff] %vm220, %v198
  %264 = vst.msk [vmem:[%s3 + $0x158] sm:$0xff] %vm220, %v199
  %265 = vst.msk [vmem:[%s3 + $0x160] sm:$0xff] %vm220, %v200
  %266 = vst.msk [vmem:[%s3 + $0x168] sm:$0xff] %vm220, %v201
  %267 = vst.msk [vmem:[%s3 + $0x170] sm:$0xff] %vm220, %v202
  %268 = vst.msk [vmem:[%s3 + $0x178] sm:$0xff] %vm220, %v203
  %269 = vst.msk [vmem:[%s3 + $0x180] sm:$0xff] %vm220, %v204
  %270 = vst.msk [vmem:[%s3 + $0x188] sm:$0xff] %vm220, %v205
  %271 = vst.msk [vmem:[%s3 + $0x190] sm:$0xff] %vm220, %v206
  %272 = vst.msk [vmem:[%s3 + $0x198] sm:$0xff] %vm220, %v207
  %273 = vst.msk [vmem:[%s3 + $0x1a0] sm:$0xff] %vm220, %v208
  %274 = vst.msk [vmem:[%s3 + $0x1a8] sm:$0xff] %vm220, %v209
  %275 = vst.msk [vmem:[%s3 + $0x1b0] sm:$0xff] %vm220, %v210
  %276 = vst.msk [vmem:[%s3 + $0x1b8] sm:$0xff] %vm220, %v211
  %277 = vst.msk [vmem:[%s3 + $0x1c0] sm:$0xff] %vm220, %v212
  %278 = vst.msk [vmem:[%s3 + $0x1c8] sm:$0xff] %vm220, %v213
  %279 = vst.msk [vmem:[%s3 + $0x1d0] sm:$0xff] %vm220, %v214
  %280 = vst.msk [vmem:[%s3 + $0x1d8] sm:$0xff] %vm220, %v215
  %281 = vst.msk [vmem:[%s3 + $0x1e0] sm:$0xff] %vm220, %v216
  %282 = vst.msk [vmem:[%s3 + $0x1e8] sm:$0xff] %vm220, %v217
  %283 = vst.msk [vmem:[%s3 + $0x1f0] sm:$0xff] %vm220, %v218
  %284 = vst.msk [vmem:[%s3 + $0x1f8] sm:$0xff] %vm220, %v219
  // Predicated region
  $region14: #{adaptor_forward.3} parent=0 // pred_check
    _
  $region15: #{adaptor_forward.3} parent=0 // pred_check_branch
    %286 = sbr.rel (0) target = $region17
  $region16: #{adaptor_forward.3} parent=0 // pred_region
    _
  $region17: #{adaptor_forward.3} parent=0 // pred_fallthru
    _
  // Predicated region
  $region18: #{adaptor_forward.3} parent=0 // pred_check
    _
  $region19: #{adaptor_forward.3} parent=0 // pred_check_branch
    %288 = sbr.rel (0) target = $region21
  $region20: #{adaptor_forward.3} parent=0 // pred_region
    _
  $region21: #{adaptor_forward.3} parent=0 // pred_fallthru
    _

// kernel: adaptor_forward.2
$region0: #{adaptor_forward.2}
  #allocation0 [shape = 'u32[]', space=smem, size = 0x4, offset = 0x4, fixed_abs, tag = 'smem constant byte address 0x4 - core index']
  #allocation1 [shape = 'u32[144,128]{1,0:T(1,128)}', space=vmem, size = 0x12000, scoped, tag = 'internal scratch']
  %s0 = inlined_call_operand.vmem [shape: f32[2,256,16], index: 0, kind: input, shape index: {}]
  %s1 = inlined_call_operand.vmem [shape: f32[2,64,16], index: 1, kind: input, shape index: {}]
  %s2 = inlined_call_operand.vmem [shape: f32[256,256], index: 2, kind: input, shape index: {}]
  %s3 = inlined_call_operand.vmem [shape: f32[256,64], index: 3, kind: input, shape index: {}]
  %s4 = inlined_call_operand.vmem [shape: f32[32,128], index: 4, kind: input, shape index: {}]
  %s5 = inlined_call_operand.vmem [shape: f32[2,256,128], index: 5, kind: output, shape index: {0}]
  %s6 = inlined_call_operand.vmem [shape: f32[2,2,2,128], index: 6, kind: output, shape index: {1}]
  %7 = xla_tuple %s5, %s6
  %s8 = sld [smem:[#allocation0]]
  $region61: #{adaptor_forward.2} parent=0
    _
  %s10 = ssub.s32 1, %s8
  %s11 = scalar_select 0, %s10, %s8
  loop: start=0, step=1, limit=6
  $region2: #{adaptor_forward.2} parent=0 // loop_pre_header
    _
  $region3: #{adaptor_forward.2} parent=0 // loop_header
    %s13 = sphi 0, %s17
    %p14 = scmp.ge.s32.totalorder %s13, 6
    %s20 = sphi 0, %s32
    %s21 = sphi 0, %s28
    %s22 = sphi 0, %s20
    %s23 = sphi 0, %s21
    %s24 = sphi 0, %s22
    %s25 = sphi 0, %s23
    %s35 = sphi 0, %s37
    %s38 = sphi 0, %s35
    %s39 = sphi 0, %s38
    %s55 = sphi 0, %s39
    %s61 = sphi 0, %s63
    %s64 = sphi 0, %s61
    %s65 = sphi 0, %s64
    %s81 = sphi 0, %s65
    %s87 = sphi 0, %s89
    %s90 = sphi 0, %s87
    %s91 = sphi 0, %s90
    %s107 = sphi 0, %s91
    %s113 = sphi 0, %s115
    %s116 = sphi 0, %s113
    %s117 = sphi 0, %s116
    %s133 = sphi 0, %s117
    %s137 = sphi 0, %s137
    %s139 = sphi 0, %s137
    %s140 = sphi 0, %s139
    %s154 = sphi 0, %s140
    %s162 = sphi 0, %s164
    %s165 = sphi 0, %s162
    %s166 = sphi 0, %s165
    %s182 = sphi 0, %s166
    %s190 = sphi 0, %s192
    %s193 = sphi 0, %s190
    %s194 = sphi 0, %s193
    %s210 = sphi 0, %s194
  $region4: #{adaptor_forward.2} parent=0 // loop_header_branch
    %16 = sbr.rel (%p14) target = $region8
  $region5: #{adaptor_forward.2} parent=0 // loop_body
    %s18 = ssub.s32 %s13, 1
    %s19 = ssub.s32 %s13, 2
    %s26 = sadd.s32 1, %s21
    %p27 = scmp.ge.s32.totalorder %s26, 2
    %s28 = scalar_select %p27, 0, %s26
    %s29 = sadd.s32 1, %s20
    %s30 = scalar_select %p27, %s29, %s20
    %p31 = scmp.ge.s32.totalorder %s30, 2
    %s32 = scalar_select %p31, 0, %s30
    %s33 = ssub.s32 %s20, %s32
    %p34 = scmp.eq.s32.totalorder %s33, 0
    %s36 = sadd.s32 %s35, 1
    %s37 = scalar_select %p34, %s35, %s36
    %p40 = pneg %p34
    %p41 = scmp.eq.s32.totalorder %s13, 3
    %p42 = por %p40, %p41
    %p43 = scmp.ne.s32.totalorder %s35, %s38
    %p44 = scmp.eq.s32.totalorder %s13, 0
    %p45 = por %p43, %p44
    %p46 = scmp.ne.s32.totalorder %s35, %s38
    %p47 = scmp.eq.s32.totalorder %s18, 3
    %p48 = por %p46, %p47
    %p49 = scmp.ne.s32.totalorder %s38, %s39
    %p50 = scmp.eq.s32.totalorder %s18, 0
    %p51 = por %p49, %p50
    %p52 = scmp.ne.s32.totalorder %s38, %s39
    %p53 = scmp.eq.s32.totalorder %s19, 3
    %p54 = por %p52, %p53
    %p56 = scmp.ne.s32.totalorder %s39, %s55
    %p57 = scmp.eq.s32.totalorder %s19, 0
    %p58 = por %p56, %p57
    %s59 = ssub.s32 %s20, %s32
    %p60 = scmp.eq.s32.totalorder %s59, 0
    %s62 = sadd.s32 %s61, 1
    %s63 = scalar_select %p60, %s61, %s62
    %p66 = pneg %p60
    %p67 = scmp.eq.s32.totalorder %s13, 3
    %p68 = por %p66, %p67
    %p69 = scmp.ne.s32.totalorder %s61, %s64
    %p70 = scmp.eq.s32.totalorder %s13, 0
    %p71 = por %p69, %p70
    %p72 = scmp.ne.s32.totalorder %s61, %s64
    %p73 = scmp.eq.s32.totalorder %s18, 3
    %p74 = por %p72, %p73
    %p75 = scmp.ne.s32.totalorder %s64, %s65
    %p76 = scmp.eq.s32.totalorder %s18, 0
    %p77 = por %p75, %p76
    %p78 = scmp.ne.s32.totalorder %s64, %s65
    %p79 = scmp.eq.s32.totalorder %s19, 3
    %p80 = por %p78, %p79
    %p82 = scmp.ne.s32.totalorder %s65, %s81
    %p83 = scmp.eq.s32.totalorder %s19, 0
    %p84 = por %p82, %p83
    %s85 = ssub.s32 %s21, %s28
    %p86 = scmp.eq.s32.totalorder %s85, 0
    %s88 = sadd.s32 %s87, 1
    %s89 = scalar_select %p86, %s87, %s88
    %p92 = pneg %p86
    %p93 = scmp.eq.s32.totalorder %s13, 3
    %p94 = por %p92, %p93
    %p95 = scmp.ne.s32.totalorder %s87, %s90
    %p96 = scmp.eq.s32.totalorder %s13, 0
    %p97 = por %p95, %p96
    %p98 = scmp.ne.s32.totalorder %s87, %s90
    %p99 = scmp.eq.s32.totalorder %s18, 3
    %p100 = por %p98, %p99
    %p101 = scmp.ne.s32.totalorder %s90, %s91
    %p102 = scmp.eq.s32.totalorder %s18, 0
    %p103 = por %p101, %p102
    %p104 = scmp.ne.s32.totalorder %s90, %s91
    %p105 = scmp.eq.s32.totalorder %s19, 3
    %p106 = por %p104, %p105
    %p108 = scmp.ne.s32.totalorder %s91, %s107
    %p109 = scmp.eq.s32.totalorder %s19, 0
    %p110 = por %p108, %p109
    %s111 = ssub.s32 %s21, %s28
    %p112 = scmp.eq.s32.totalorder %s111, 0
    %s114 = sadd.s32 %s113, 1
    %s115 = scalar_select %p112, %s113, %s114
    %p118 = pneg %p112
    %p119 = scmp.eq.s32.totalorder %s13, 3
    %p120 = por %p118, %p119
    %p121 = scmp.ne.s32.totalorder %s113, %s116
    %p122 = scmp.eq.s32.totalorder %s13, 0
    %p123 = por %p121, %p122
    %p124 = scmp.ne.s32.totalorder %s113, %s116
    %p125 = scmp.eq.s32.totalorder %s18, 3
    %p126 = por %p124, %p125
    %p127 = scmp.ne.s32.totalorder %s116, %s117
    %p128 = scmp.eq.s32.totalorder %s18, 0
    %p129 = por %p127, %p128
    %p130 = scmp.ne.s32.totalorder %s116, %s117
    %p131 = scmp.eq.s32.totalorder %s19, 3
    %p132 = por %p130, %p131
    %p134 = scmp.ne.s32.totalorder %s117, %s133
    %p135 = scmp.eq.s32.totalorder %s19, 0
    %p136 = por %p134, %p135
    %s138 = sadd.s32 %s137, 1
    %p141 = scmp.eq.s32.totalorder %s13, 3
    %p142 = scmp.ne.s32.totalorder %s137, %s139
    %p143 = scmp.eq.s32.totalorder %s13, 0
    %p144 = por %p142, %p143
    %p145 = scmp.ne.s32.totalorder %s137, %s139
    %p146 = scmp.eq.s32.totalorder %s18, 3
    %p147 = por %p145, %p146
    %p148 = scmp.ne.s32.totalorder %s139, %s140
    %p149 = scmp.eq.s32.totalorder %s18, 0
    %p150 = por %p148, %p149
    %p151 = scmp.ne.s32.totalorder %s139, %s140
    %p152 = scmp.eq.s32.totalorder %s19, 3
    %p153 = por %p151, %p152
    %p155 = scmp.ne.s32.totalorder %s140, %s154
    %p156 = scmp.eq.s32.totalorder %s19, 0
    %p157 = por %p155, %p156
    %s158 = ssub.s32 %s20, %s32
    %s159 = ssub.s32 %s21, %s28
    %s160 = sor.u32 %s158, %s159
    %p161 = scmp.eq.s32.totalorder %s160, 0
    %s163 = sadd.s32 %s162, 1
    %s164 = scalar_select %p161, %s162, %s163
    %p167 = pneg %p161
    %p168 = scmp.eq.s32.totalorder %s13, 3
    %p169 = por %p167, %p168
    %p170 = scmp.ne.s32.totalorder %s162, %s165
    %p171 = scmp.eq.s32.totalorder %s13, 0
    %p172 = por %p170, %p171
    %p173 = scmp.ne.s32.totalorder %s162, %s165
    %p174 = scmp.eq.s32.totalorder %s18, 3
    %p175 = por %p173, %p174
    %p176 = scmp.ne.s32.totalorder %s165, %s166
    %p177 = scmp.eq.s32.totalorder %s18, 0
    %p178 = por %p176, %p177
    %p179 = scmp.ne.s32.totalorder %s165, %s166
    %p180 = scmp.eq.s32.totalorder %s19, 3
    %p181 = por %p179, %p180
    %p183 = scmp.ne.s32.totalorder %s166, %s182
    %p184 = scmp.eq.s32.totalorder %s19, 0
    %p185 = por %p183, %p184
    %s186 = ssub.s32 %s20, %s32
    %s187 = ssub.s32 %s21, %s28
    %s188 = sor.u32 %s186, %s187
    %p189 = scmp.eq.s32.totalorder %s188, 0
    %s191 = sadd.s32 %s190, 1
    %s192 = scalar_select %p189, %s190, %s191
    %p195 = pneg %p189
    %p196 = scmp.eq.s32.totalorder %s13, 3
    %p197 = por %p195, %p196
    %p198 = scmp.ne.s32.totalorder %s190, %s193
    %p199 = scmp.eq.s32.totalorder %s13, 0
    %p200 = por %p198, %p199
    %p201 = scmp.ne.s32.totalorder %s190, %s193
    %p202 = scmp.eq.s32.totalorder %s18, 3
    %p203 = por %p201, %p202
    %p204 = scmp.ne.s32.totalorder %s193, %s194
    %p205 = scmp.eq.s32.totalorder %s18, 0
    %p206 = por %p204, %p205
    %p207 = scmp.ne.s32.totalorder %s193, %s194
    %p208 = scmp.eq.s32.totalorder %s19, 3
    %p209 = por %p207, %p208
    %p211 = scmp.ne.s32.totalorder %s194, %s210
    %p212 = scmp.eq.s32.totalorder %s19, 0
    %p213 = por %p211, %p212
    %p214 = scmp.le.s32.totalorder 1, %s13
    %p215 = scmp.lt.s32.totalorder %s13, 5
    %p216 = pnand %p214, %p215
    %p217 = pneg %p216
    // Predicated region
    $region9: #{adaptor_forward.2} parent=5 // pred_check
      _
    $region10: #{adaptor_forward.2} parent=5 // pred_check_branch
      %219 = sbr.rel (%p216) target = $region12
    $region11: #{adaptor_forward.2} parent=5 // pred_region
      %s220 = ssub.s32 %s13, 1
      // Predicated region
      $region13: #{adaptor_forward.2} parent=11 // pred_check
        %p221 = pneg %p150
      $region14: #{adaptor_forward.2} parent=11 // pred_check_branch
        %223 = sbr.rel (%p221) target = $region16
      $region15: #{adaptor_forward.2} parent=11 // pred_region
        _
      $region16: #{adaptor_forward.2} parent=11 // pred_fallthru
        _
    $region12: #{adaptor_forward.2} parent=5 // pred_fallthru
      _
    %p224 = scmp.lt.s32.totalorder %s13, 4
    // Predicated region
    $region17: #{adaptor_forward.2} parent=5 // pred_check
      %p225 = pneg %p224
    $region18: #{adaptor_forward.2} parent=5 // pred_check_branch
      %227 = sbr.rel (%p225) target = $region20
    $region19: #{adaptor_forward.2} parent=5 // pred_region
      // Predicated region
      $region21: #{adaptor_forward.2} parent=19 // pred_check
        %p228 = pneg %p45
      $region22: #{adaptor_forward.2} parent=19 // pred_check_branch
        %230 = sbr.rel (%p228) target = $region24
      $region23: #{adaptor_forward.2} parent=19 // pred_region
        %p231 = scmp.lt.s32.totalorder %s20, 1
        %s232 = scalar_select %p231, %s20, 1
        %s233 = smul.addr %s232, 32
        %s234 = smul.addr %s233, 8
        %s235 = scalar_lea.vmem %s0, %s234
      $region24: #{adaptor_forward.2} parent=19 // pred_fallthru
        _
      // Predicated region
      $region25: #{adaptor_forward.2} parent=19 // pred_check
        %p236 = pneg %p71
      $region26: #{adaptor_forward.2} parent=19 // pred_check_branch
        %238 = sbr.rel (%p236) target = $region28
      $region27: #{adaptor_forward.2} parent=19 // pred_region
        %p239 = scmp.lt.s32.totalorder %s20, 1
        %s240 = scalar_select %p239, %s20, 1
        %s241 = smul.addr %s240, 8
        %s242 = smul.addr %s241, 8
        %s243 = scalar_lea.vmem %s1, %s242
      $region28: #{adaptor_forward.2} parent=19 // pred_fallthru
        _
      // Predicated region
      $region29: #{adaptor_forward.2} parent=19 // pred_check
        %p244 = pneg %p97
      $region30: #{adaptor_forward.2} parent=19 // pred_check_branch
        %246 = sbr.rel (%p244) target = $region32
      $region31: #{adaptor_forward.2} parent=19 // pred_region
        %s247 = smul.u32 16, %s21
        %p248 = scmp.lt.s32.totalorder %s247, 31
        %s249 = scalar_select %p248, %s247, 31
        %s250 = smul.addr %s249, 2
        %s251 = smul.addr %s250, 8
        %s252 = scalar_lea.vmem %s2, %s251
        %s253 = smul.u32 16, %s21
      $region32: #{adaptor_forward.2} parent=19 // pred_fallthru
        _
      // Predicated region
      $region33: #{adaptor_forward.2} parent=19 // pred_check
        %p254 = pneg %p123
      $region34: #{adaptor_forward.2} parent=19 // pred_check_branch
        %256 = sbr.rel (%p254) target = $region36
      $region35: #{adaptor_forward.2} parent=19 // pred_region
        %s257 = smul.u32 16, %s21
        %p258 = scmp.lt.s32.totalorder %s257, 31
        %s259 = scalar_select %p258, %s257, 31
        %s260 = smul.addr %s259, 8
        %s261 = scalar_lea.vmem %s3, %s260
        %s262 = smul.u32 16, %s21
      $region36: #{adaptor_forward.2} parent=19 // pred_fallthru
        _
    $region20: #{adaptor_forward.2} parent=5 // pred_fallthru
      _
    %p263 = scmp.le.s32.totalorder 1, %s13
    %p264 = scmp.lt.s32.totalorder %s13, 5
    %p265 = pnand %p263, %p264
    %p266 = pneg %p265
    // Predicated region
    $region37: #{adaptor_forward.2} parent=5 // pred_check
      _
    $region38: #{adaptor_forward.2} parent=5 // pred_check_branch
      %268 = sbr.rel (%p265) target = $region40
    $region39: #{adaptor_forward.2} parent=5 // pred_region
      %s269 = ssub.s32 %s13, 1
      %p270 = scmp.lt.s32.totalorder %s22, 1
      %s271 = scalar_select %p270, %s22, 1
      %s272 = smul.addr %s271, 32
      %s273 = smul.addr %s272, 8
      %s274 = scalar_lea.vmem %s0, %s273
      %p275 = pneg %p51
      %p276 = pneg %p48
      %p277 = scmp.lt.s32.totalorder %s22, 1
      %s278 = scalar_select %p277, %s22, 1
      %s279 = smul.addr %s278, 8
      %s280 = smul.addr %s279, 8
      %s281 = scalar_lea.vmem %s1, %s280
      %p282 = pneg %p77
      %p283 = pneg %p74
      %s284 = smul.u32 16, %s23
      %p285 = scmp.lt.s32.totalorder %s284, 31
      %s286 = scalar_select %p285, %s284, 31
      %s287 = smul.addr %s286, 2
      %s288 = smul.addr %s287, 8
      %s289 = scalar_lea.vmem %s2, %s288
      %p290 = pneg %p103
      %p291 = pneg %p100
      %s292 = smul.u32 16, %s23
      %p293 = scmp.lt.s32.totalorder %s292, 31
      %s294 = scalar_select %p293, %s292, 31
      %s295 = smul.addr %s294, 8
      %s296 = scalar_lea.vmem %s3, %s295
      %p297 = pneg %p129
      %p298 = pneg %p126
      %p299 = pneg %p150
      %p300 = pneg %p147
      %p301 = pneg %p178
      %p302 = pneg %p175
      %s303 = smul.u32 16, %s23
      %p304 = scmp.lt.s32.totalorder %s22, 1
      %s305 = scalar_select %p304, %s22, 1
      %p306 = scmp.lt.s32.totalorder %s303, 31
      %s307 = scalar_select %p306, %s303, 31
      %s308 = smul.addr %s305, 32
      %s309 = sadd.s32 %s307, %s308
      %s310 = smul.addr %s309, 8
      %s311 = scalar_lea.vmem %s5, %s310
      %p312 = pneg %p206
      %p313 = pneg %p203
      %p314 = scmp.lt.s32.totalorder %s22, 1
      %s315 = scalar_select %p314, %s22, 1
      %p316 = scmp.lt.s32.totalorder %s23, 1
      %s317 = scalar_select %p316, %s23, 1
      %s318 = smul.addr %s315, 2
      %s319 = sadd.s32 %s317, %s318
      %s320 = smul.addr %s319, 2
      %s321 = scalar_lea.vmem %s6, %s320
      %p322 = scmp.lt.s32.totalorder %s22, 1
      %s323 = scalar_select %p322, %s22, 1
      %s324 = smul.addr %s323, 32
      %s325 = smul.addr %s324, 8
      %s326 = scalar_lea.vmem %s0, %s325
      %p327 = scmp.lt.s32.totalorder %s22, 1
      %s328 = scalar_select %p327, %s22, 1
      %s329 = smul.addr %s328, 8
      %s330 = smul.addr %s329, 8
      %s331 = scalar_lea.vmem %s1, %s330
      %s332 = smul.u32 16, %s23
      %p333 = scmp.lt.s32.totalorder %s332, 31
      %s334 = scalar_select %p333, %s332, 31
      %s335 = smul.addr %s334, 2
      %s336 = smul.addr %s335, 8
      %s337 = scalar_lea.vmem %s2, %s336
      %s338 = smul.u32 16, %s23
      %s339 = smul.u32 16, %s23
      %p340 = scmp.lt.s32.totalorder %s339, 31
      %s341 = scalar_select %p340, %s339, 31
      %s342 = smul.addr %s341, 8
      %s343 = scalar_lea.vmem %s3, %s342
      %s344 = smul.u32 16, %s23
      %s345 = smul.u32 16, %s23
      %p346 = scmp.lt.s32.totalorder %s22, 1
      %s347 = scalar_select %p346, %s22, 1
      %p348 = scmp.lt.s32.totalorder %s345, 31
      %s349 = scalar_select %p348, %s345, 31
      %s350 = smul.addr %s347, 32
      %s351 = sadd.s32 %s349, %s350
      %s352 = smul.addr %s351, 8
      %s353 = scalar_lea.vmem %s5, %s352
      %s354 = smul.u32 16, %s23
      %p355 = scmp.lt.s32.totalorder %s22, 1
      %s356 = scalar_select %p355, %s22, 1
      %p357 = scmp.lt.s32.totalorder %s23, 1
      %s358 = scalar_select %p357, %s23, 1
      %s359 = smul.addr %s356, 2
      %s360 = sadd.s32 %s358, %s359
      %s361 = smul.addr %s360, 2
      %s362 = scalar_lea.vmem %s6, %s361
      %v363 = vld [vmem:[%s337] sm:$0xff]
      %v364 = vld [vmem:[%s337 + $0x8] sm:$0xff]
      %v365 = vld [vmem:[%s337 + $0x10] sm:$0xff]
      %v366 = vld [vmem:[%s337 + $0x18] sm:$0xff]
      %v367 = vld [vmem:[%s337 + $0x20] sm:$0xff]
      %v368 = vld [vmem:[%s337 + $0x28] sm:$0xff]
      %v369 = vld [vmem:[%s337 + $0x30] sm:$0xff]
      %v370 = vld [vmem:[%s337 + $0x38] sm:$0xff]
      %v371 = vld [vmem:[%s337 + $0x40] sm:$0xff]
      %v372 = vld [vmem:[%s337 + $0x48] sm:$0xff]
      %v373 = vld [vmem:[%s337 + $0x50] sm:$0xff]
      %v374 = vld [vmem:[%s337 + $0x58] sm:$0xff]
      %v375 = vld [vmem:[%s337 + $0x60] sm:$0xff]
      %v376 = vld [vmem:[%s337 + $0x68] sm:$0xff]
      %v377 = vld [vmem:[%s337 + $0x70] sm:$0xff]
      %v378 = vld [vmem:[%s337 + $0x78] sm:$0xff]
      %v379 = vld [vmem:[%s337 + $0x80] sm:$0xff]
      %v380 = vld [vmem:[%s337 + $0x88] sm:$0xff]
      %v381 = vld [vmem:[%s337 + $0x90] sm:$0xff]
      %v382 = vld [vmem:[%s337 + $0x98] sm:$0xff]
      %v383 = vld [vmem:[%s337 + $0xa0] sm:$0xff]
      %v384 = vld [vmem:[%s337 + $0xa8] sm:$0xff]
      %v385 = vld [vmem:[%s337 + $0xb0] sm:$0xff]
      %v386 = vld [vmem:[%s337 + $0xb8] sm:$0xff]
      %v387 = vld [vmem:[%s337 + $0xc0] sm:$0xff]
      %v388 = vld [vmem:[%s337 + $0xc8] sm:$0xff]
      %v389 = vld [vmem:[%s337 + $0xd0] sm:$0xff]
      %v390 = vld [vmem:[%s337 + $0xd8] sm:$0xff]
      %v391 = vld [vmem:[%s337 + $0xe0] sm:$0xff]
      %v392 = vld [vmem:[%s337 + $0xe8] sm:$0xff]
      %v393 = vld [vmem:[%s337 + $0xf0] sm:$0xff]
      %v394 = vld [vmem:[%s337 + $0xf8] sm:$0xff]
      %v395 = vld [vmem:[%s326] sm:$0xff]
      %v396 = vld [vmem:[%s326 + $0x8] sm:$0xff]
      %v397 = vld [vmem:[%s326 + $0x10] sm:$0xff]
      %v398 = vld [vmem:[%s326 + $0x18] sm:$0xff]
      %v399 = vld [vmem:[%s326 + $0x20] sm:$0xff]
      %v400 = vld [vmem:[%s326 + $0x28] sm:$0xff]
      %v401 = vld [vmem:[%s326 + $0x30] sm:$0xff]
      %v402 = vld [vmem:[%s326 + $0x38] sm:$0xff]
      %v403 = vld [vmem:[%s326 + $0x40] sm:$0xff]
      %v404 = vld [vmem:[%s326 + $0x48] sm:$0xff]
      %v405 = vld [vmem:[%s326 + $0x50] sm:$0xff]
      %v406 = vld [vmem:[%s326 + $0x58] sm:$0xff]
      %v407 = vld [vmem:[%s326 + $0x60] sm:$0xff]
      %v408 = vld [vmem:[%s326 + $0x68] sm:$0xff]
      %v409 = vld [vmem:[%s326 + $0x70] sm:$0xff]
      %v410 = vld [vmem:[%s326 + $0x78] sm:$0xff]
      %v411 = vld [vmem:[%s326 + $0x80] sm:$0xff]
      %v412 = vld [vmem:[%s326 + $0x88] sm:$0xff]
      %v413 = vld [vmem:[%s326 + $0x90] sm:$0xff]
      %v414 = vld [vmem:[%s326 + $0x98] sm:$0xff]
      %v415 = vld [vmem:[%s326 + $0xa0] sm:$0xff]
      %v416 = vld [vmem:[%s326 + $0xa8] sm:$0xff]
      %v417 = vld [vmem:[%s326 + $0xb0] sm:$0xff]
      %v418 = vld [vmem:[%s326 + $0xb8] sm:$0xff]
      %v419 = vld [vmem:[%s326 + $0xc0] sm:$0xff]
      %v420 = vld [vmem:[%s326 + $0xc8] sm:$0xff]
      %v421 = vld [vmem:[%s326 + $0xd0] sm:$0xff]
      %v422 = vld [vmem:[%s326 + $0xd8] sm:$0xff]
      %v423 = vld [vmem:[%s326 + $0xe0] sm:$0xff]
      %v424 = vld [vmem:[%s326 + $0xe8] sm:$0xff]
      %v425 = vld [vmem:[%s326 + $0xf0] sm:$0xff]
      %v426 = vld [vmem:[%s326 + $0xf8] sm:$0xff]
      %427 = vmatprep.subr.mxu0 0.0
      %428 = vmatpush1.msra.mxu0 %v395
      %429 = vmatprep.subr.mxu0 0.0
      %430 = vmatpush1.msra.mxu0 %v396
      %431 = vmatprep.subr.mxu0 0.0
      %432 = vmatpush1.msra.mxu0 %v397
      %433 = vmatprep.subr.mxu0 0.0
      %434 = vmatpush1.msra.mxu0 %v398
      %435 = vmatprep.subr.mxu0 0.0
      %436 = vmatpush1.msra.mxu0 %v399
      %437 = vmatprep.subr.mxu0 0.0
      %438 = vmatpush1.msra.mxu0 %v400
      %439 = vmatprep.subr.mxu0 0.0
      %440 = vmatpush1.msra.mxu0 %v401
      %441 = vmatprep.subr.mxu0 0.0
      %442 = vmatpush1.msra.mxu0 %v402
      %443 = vmatprep.subr.mxu0 0.0
      %444 = vmatpush1.msra.mxu0 %v403
      %445 = vmatprep.subr.mxu0 0.0
      %446 = vmatpush1.msra.mxu0 %v404
      %447 = vmatprep.subr.mxu0 0.0
      %448 = vmatpush1.msra.mxu0 %v405
      %449 = vmatprep.subr.mxu0 0.0
      %450 = vmatpush1.msra.mxu0 %v406
      %451 = vmatprep.subr.mxu0 0.0
      %452 = vmatpush1.msra.mxu0 %v407
      %453 = vmatprep.subr.mxu0 0.0
      %454 = vmatpush1.msra.mxu0 %v408
      %455 = vmatprep.subr.mxu0 0.0
      %456 = vmatpush1.msra.mxu0 %v409
      %457 = vmatprep.subr.mxu0 0.0
      %458 = vmatpush1.msra.mxu0 %v410
      %459 = vmatprep.subr.mxu0 0.0
      %460 = vmatpush1.msra.mxu0 %v411
      %461 = vmatprep.subr.mxu0 0.0
      %462 = vmatpush1.msra.mxu0 %v412
      %463 = vmatprep.subr.mxu0 0.0
      %464 = vmatpush1.msra.mxu0 %v413
      %465 = vmatprep.subr.mxu0 0.0
      %466 = vmatpush1.msra.mxu0 %v414
      %467 = vmatprep.subr.mxu0 0.0
      %468 = vmatpush1.msra.mxu0 %v415
      %469 = vmatprep.subr.mxu0 0.0
      %470 = vmatpush1.msra.mxu0 %v416
      %471 = vmatprep.subr.mxu0 0.0
      %472 = vmatpush1.msra.mxu0 %v417
      %473 = vmatprep.subr.mxu0 0.0
      %474 = vmatpush1.msra.mxu0 %v418
      %475 = vmatprep.subr.mxu0 0.0
      %476 = vmatpush1.msra.mxu0 %v419
      %477 = vmatprep.subr.mxu0 0.0
      %478 = vmatpush1.msra.mxu0 %v420
      %479 = vmatprep.subr.mxu0 0.0
      %480 = vmatpush1.msra.mxu0 %v421
      %481 = vmatprep.subr.mxu0 0.0
      %482 = vmatpush1.msra.mxu0 %v422
      %483 = vmatprep.subr.mxu0 0.0
      %484 = vmatpush1.msra.mxu0 %v423
      %485 = vmatprep.subr.mxu0 0.0
      %486 = vmatpush1.msra.mxu0 %v424
      %487 = vmatprep.subr.mxu0 0.0
      %488 = vmatpush1.msra.mxu0 %v425
      %489 = vmatprep.subr.mxu0 0.0
      %490 = vmatpush1.msra.mxu0 %v426
      %491 = vmatprep.mubr.f32.mxu0 %v364
      %492 = vmatmul.mubr.f32.gmra.mrb[0].mxu0 %v363
      %v493 = vpop.f32.mrb[0].mxu0
      %v494 = vadd.f32 0.0, %v493
      %v495 = vpop.f32.mrb[0].mxu0
      %496 = vmatprep.mubr.f32.mxu0 %v366
      %497 = vmatmul.mubr.f32.gmra.mrb[0].mxu0 %v365
      %v498 = vpop.f32.mrb[0].mxu0
      %v499 = vadd.f32 0.0, %v498
      %v500 = vpop.f32.mrb[0].mxu0
      %501 = vmatprep.mubr.f32.mxu0 %v368
      %502 = vmatmul.mubr.f32.gmra.mrb[0].mxu0 %v367
      %v503 = vpop.f32.mrb[0].mxu0
      %v504 = vadd.f32 0.0, %v503
      %v505 = vpop.f32.mrb[0].mxu0
      %506 = vmatprep.mubr.f32.mxu0 %v370
      %507 = vmatmul.mubr.f32.gmra.mrb[0].mxu0 %v369
      %v508 = vpop.f32.mrb[0].mxu0
      %v509 = vadd.f32 0.0, %v508
      %v510 = vpop.f32.mrb[0].mxu0
      %511 = vmatprep.mubr.f32.mxu0 %v372
      %512 = vmatmul.mubr.f32.gmra.mrb[0].mxu0 %v371
      %v513 = vpop.f32.mrb[0].mxu0
      %v514 = vadd.f32 0.0, %v513
      %v515 = vpop.f32.mrb[0].mxu0
      %516 = vmatprep.mubr.f32.mxu0 %v374
      %517 = vmatmul.mubr.f32.gmra.mrb[0].mxu0 %v373
      %v518 = vpop.f32.mrb[0].mxu0
      %v519 = vadd.f32 0.0, %v518
      %v520 = vpop.f32.mrb[0].mxu0
      %521 = vmatprep.mubr.f32.mxu0 %v376
      %522 = vmatmul.mubr.f32.gmra.mrb[0].mxu0 %v375
      %v523 = vpop.f32.mrb[0].mxu0
      %v524 = vadd.f32 0.0, %v523
      %v525 = vpop.f32.mrb[0].mxu0
      %526 = vmatprep.mubr.f32.mxu0 %v378
      %527 = vmatmul.mubr.f32.gmra.mrb[0].mxu0 %v377
      %v528 = vpop.f32.mrb[0].mxu0
      %v529 = vadd.f32 0.0, %v528
      %v530 = vpop.f32.mrb[0].mxu0
      %531 = vmatprep.mubr.f32.mxu0 %v380
      %532 = vmatmul.mubr.f32.gmra.mrb[0].mxu0 %v379
      %v533 = vpop.f32.mrb[0].mxu0
      %v534 = vadd.f32 0.0, %v533
      %v535 = vpop.f32.mrb[0].mxu0
      %536 = vmatprep.mubr.f32.mxu0 %v382
      %537 = vmatmul.mubr.f32.gmra.mrb[0].mxu0 %v381
      %v538 = vpop.f32.mrb[0].mxu0
      %v539 = vadd.f32 0.0, %v538
      %v540 = vpop.f32.mrb[0].mxu0
      %541 = vmatprep.mubr.f32.mxu0 %v384
      %542 = vmatmul.mubr.f32.gmra.mrb[0].mxu0 %v383
      %v543 = vpop.f32.mrb[0].mxu0
      %v544 = vadd.f32 0.0, %v543
      %v545 = vpop.f32.mrb[0].mxu0
      %546 = vmatprep.mubr.f32.mxu0 %v386
      %547 = vmatmul.mubr.f32.gmra.mrb[0].mxu0 %v385
      %v548 = vpop.f32.mrb[0].mxu0
      %v549 = vadd.f32 0.0, %v548
      %v550 = vpop.f32.mrb[0].mxu0
      %551 = vmatprep.mubr.f32.mxu0 %v388
      %552 = vmatmul.mubr.f32.gmra.mrb[0].mxu0 %v387
      %v553 = vpop.f32.mrb[0].mxu0
      %v554 = vadd.f32 0.0, %v553
      %v555 = vpop.f32.mrb[0].mxu0
      %556 = vmatprep.mubr.f32.mxu0 %v390
      %557 = vmatmul.mubr.f32.gmra.mrb[0].mxu0 %v389
      %v558 = vpop.f32.mrb[0].mxu0
      %v559 = vadd.f32 0.0, %v558
      %v560 = vpop.f32.mrb[0].mxu0
      %561 = vmatprep.mubr.f32.mxu0 %v392
      %562 = vmatmul.mubr.f32.gmra.mrb[0].mxu0 %v391
      %v563 = vpop.f32.mrb[0].mxu0
      %v564 = vadd.f32 0.0, %v563
      %v565 = vpop.f32.mrb[0].mxu0
      %566 = vmatprep.mubr.f32.mxu0 %v394
      %567 = vmatmul.mubr.f32.gmra.mrb[0].mxu0 %v393
      %v568 = vpop.f32.mrb[0].mxu0
      %v569 = vadd.f32 0.0, %v568
      %v570 = vpop.f32.mrb[0].mxu0
      %571 = vdwg.mxu0
      %v572 = vld [vmem:[%s343] sm:$0xff]
      %v573 = vld [vmem:[%s343 + $0x8] sm:$0xff]
      %v574 = vld [vmem:[%s343 + $0x10] sm:$0xff]
      %v575 = vld [vmem:[%s343 + $0x18] sm:$0xff]
      %v576 = vld [vmem:[%s343 + $0x20] sm:$0xff]
      %v577 = vld [vmem:[%s343 + $0x28] sm:$0xff]
      %v578 = vld [vmem:[%s343 + $0x30] sm:$0xff]
      %v579 = vld [vmem:[%s343 + $0x38] sm:$0xff]
      %v580 = vld [vmem:[%s343 + $0x40] sm:$0xff]
      %v581 = vld [vmem:[%s343 + $0x48] sm:$0xff]
      %v582 = vld [vmem:[%s343 + $0x50] sm:$0xff]
      %v583 = vld [vmem:[%s343 + $0x58] sm:$0xff]
      %v584 = vld [vmem:[%s343 + $0x60] sm:$0xff]
      %v585 = vld [vmem:[%s343 + $0x68] sm:$0xff]
      %v586 = vld [vmem:[%s343 + $0x70] sm:$0xff]
      %v587 = vld [vmem:[%s343 + $0x78] sm:$0xff]
      %v588 = vld [vmem:[%s331] sm:$0xff]
      %v589 = vld [vmem:[%s331 + $0x8] sm:$0xff]
      %v590 = vld [vmem:[%s331 + $0x10] sm:$0xff]
      %v591 = vld [vmem:[%s331 + $0x18] sm:$0xff]
      %v592 = vld [vmem:[%s331 + $0x20] sm:$0xff]
      %v593 = vld [vmem:[%s331 + $0x28] sm:$0xff]
      %v594 = vld [vmem:[%s331 + $0x30] sm:$0xff]
      %v595 = vld [vmem:[%s331 + $0x38] sm:$0xff]
      %vm596 = vcmask 523264
      %v598 = vsel %vm596, %v572, 0
      %v601 = vsel %vm596, %v573, 0
      %v604 = vsel %vm596, %v574, 0
      %v607 = vsel %vm596, %v575, 0
      %v610 = vsel %vm596, %v576, 0
      %v613 = vsel %vm596, %v577, 0
      %v616 = vsel %vm596, %v578, 0
      %v619 = vsel %vm596, %v579, 0
      %v622 = vsel %vm596, %v580, 0
      %v625 = vsel %vm596, %v581, 0
      %v628 = vsel %vm596, %v582, 0
      %v631 = vsel %vm596, %v583, 0
      %v634 = vsel %vm596, %v584, 0
      %v637 = vsel %vm596, %v585, 0
      %v640 = vsel %vm596, %v586, 0
      %v643 = vsel %vm596, %v587, 0
      %645 = vmatprep.subr.mxu0 0.0
      %646 = vmatpush1.msra.mxu0 %v588
      %647 = vmatprep.subr.mxu0 0.0
      %648 = vmatpush1.msra.mxu0 %v589
      %649 = vmatprep.subr.mxu0 0.0
      %650 = vmatpush1.msra.mxu0 %v590
      %651 = vmatprep.subr.mxu0 0.0
      %652 = vmatpush1.msra.mxu0 %v591
      %653 = vmatprep.subr.mxu0 0.0
      %654 = vmatpush1.msra.mxu0 %v592
      %655 = vmatprep.subr.mxu0 0.0
      %656 = vmatpush1.msra.mxu0 %v593
      %657 = vmatprep.subr.mxu0 0.0
      %658 = vmatpush1.msra.mxu0 %v594
      %659 = vmatprep.subr.mxu0 0.0
      %660 = vmatpush1.msra.mxu0 %v595
      %661 = vmatprep.subr.mxu0 0.0
      %662 = vmatpush1.msra.mxu0 0.0
      %663 = vmatprep.subr.mxu0 0.0
      %664 = vmatpush1.msra.mxu0 0.0
      %665 = vmatprep.subr.mxu0 0.0
      %666 = vmatpush1.msra.mxu0 0.0
      %667 = vmatprep.subr.mxu0 0.0
      %668 = vmatpush1.msra.mxu0 0.0
      %669 = vmatprep.subr.mxu0 0.0
      %670 = vmatpush1.msra.mxu0 0.0
      %671 = vmatprep.subr.mxu0 0.0
      %672 = vmatpush1.msra.mxu0 0.0
      %673 = vmatprep.subr.mxu0 0.0
      %674 = vmatpush1.msra.mxu0 0.0
      %675 = vmatprep.subr.mxu0 0.0
      %676 = vmatpush1.msra.mxu0 0.0
      %677 = vmatprep.subr.mxu0 0.0
      %678 = vmatpush1.msra.mxu0 0.0
      %679 = vmatprep.subr.mxu0 0.0
      %680 = vmatpush1.msra.mxu0 0.0
      %681 = vmatprep.subr.mxu0 0.0
      %682 = vmatpush1.msra.mxu0 0.0
      %683 = vmatprep.subr.mxu0 0.0
      %684 = vmatpush1.msra.mxu0 0.0
      %685 = vmatprep.subr.mxu0 0.0
      %686 = vmatpush1.msra.mxu0 0.0
      %687 = vmatprep.subr.mxu0 0.0
      %688 = vmatpush1.msra.mxu0 0.0
      %689 = vmatprep.subr.mxu0 0.0
      %690 = vmatpush1.msra.mxu0 0.0
      %691 = vmatprep.subr.mxu0 0.0
      %692 = vmatpush1.msra.mxu0 0.0
      %693 = vmatprep.subr.mxu0 0.0
      %694 = vmatpush1.msra.mxu0 0.0
      %695 = vmatprep.subr.mxu0 0.0
      %696 = vmatpush1.msra.mxu0 0.0
      %697 = vmatprep.subr.mxu0 0.0
      %698 = vmatpush1.msra.mxu0 0.0
      %699 = vmatprep.subr.mxu0 0.0
      %700 = vmatpush1.msra.mxu0 0.0
      %701 = vmatprep.subr.mxu0 0.0
      %702 = vmatpush1.msra.mxu0 0.0
      %703 = vmatprep.subr.mxu0 0.0
      %704 = vmatpush1.msra.mxu0 0.0
      %705 = vmatprep.subr.mxu0 0.0
      %706 = vmatpush1.msra.mxu0 0.0
      %707 = vmatprep.subr.mxu0 0.0
      %708 = vmatpush1.msra.mxu0 0.0
      %709 = vmatprep.mubr.f32.mxu0 0.0
      %710 = vmatmul.mubr.f32.gmra.mrb[0].mxu0 %v598
      %v711 = vpop.f32.mrb[0].mxu0
      %v712 = vadd.f32 0.0, %v711
      %v713 = vpop.f32.mrb[0].mxu0
      %714 = vmatprep.mubr.f32.mxu0 0.0
      %715 = vmatmul.mubr.f32.gmra.mrb[0].mxu0 %v601
      %v716 = vpop.f32.mrb[0].mxu0
      %v717 = vadd.f32 0.0, %v716
      %v718 = vpop.f32.mrb[0].mxu0
      %719 = vmatprep.mubr.f32.mxu0 0.0
      %720 = vmatmul.mubr.f32.gmra.mrb[0].mxu0 %v604
      %v721 = vpop.f32.mrb[0].mxu0
      %v722 = vadd.f32 0.0, %v721
      %v723 = vpop.f32.mrb[0].mxu0
      %724 = vmatprep.mubr.f32.mxu0 0.0
      %725 = vmatmul.mubr.f32.gmra.mrb[0].mxu0 %v607
      %v726 = vpop.f32.mrb[0].mxu0
      %v727 = vadd.f32 0.0, %v726
      %v728 = vpop.f32.mrb[0].mxu0
      %729 = vmatprep.mubr.f32.mxu0 0.0
      %730 = vmatmul.mubr.f32.gmra.mrb[0].mxu0 %v610
      %v731 = vpop.f32.mrb[0].mxu0
      %v732 = vadd.f32 0.0, %v731
      %v733 = vpop.f32.mrb[0].mxu0
      %734 = vmatprep.mubr.f32.mxu0 0.0
      %735 = vmatmul.mubr.f32.gmra.mrb[0].mxu0 %v613
      %v736 = vpop.f32.mrb[0].mxu0
      %v737 = vadd.f32 0.0, %v736
      %v738 = vpop.f32.mrb[0].mxu0
      %739 = vmatprep.mubr.f32.mxu0 0.0
      %740 = vmatmul.mubr.f32.gmra.mrb[0].mxu0 %v616
      %v741 = vpop.f32.mrb[0].mxu0
      %v742 = vadd.f32 0.0, %v741
      %v743 = vpop.f32.mrb[0].mxu0
      %744 = vmatprep.mubr.f32.mxu0 0.0
      %745 = vmatmul.mubr.f32.gmra.mrb[0].mxu0 %v619
      %v746 = vpop.f32.mrb[0].mxu0
      %v747 = vadd.f32 0.0, %v746
      %v748 = vpop.f32.mrb[0].mxu0
      %749 = vmatprep.mubr.f32.mxu0 0.0
      %750 = vmatmul.mubr.f32.gmra.mrb[0].mxu0 %v622
      %v751 = vpop.f32.mrb[0].mxu0
      %v752 = vadd.f32 0.0, %v751
      %v753 = vpop.f32.mrb[0].mxu0
      %754 = vmatprep.mubr.f32.mxu0 0.0
      %755 = vmatmul.mubr.f32.gmra.mrb[0].mxu0 %v625
      %v756 = vpop.f32.mrb[0].mxu0
      %v757 = vadd.f32 0.0, %v756
      %v758 = vpop.f32.mrb[0].mxu0
      %759 = vmatprep.mubr.f32.mxu0 0.0
      %760 = vmatmul.mubr.f32.gmra.mrb[0].mxu0 %v628
      %v761 = vpop.f32.mrb[0].mxu0
      %v762 = vadd.f32 0.0, %v761
      %v763 = vpop.f32.mrb[0].mxu0
      %764 = vmatprep.mubr.f32.mxu0 0.0
      %765 = vmatmul.mubr.f32.gmra.mrb[0].mxu0 %v631
      %v766 = vpop.f32.mrb[0].mxu0
      %v767 = vadd.f32 0.0, %v766
      %v768 = vpop.f32.mrb[0].mxu0
      %769 = vmatprep.mubr.f32.mxu0 0.0
      %770 = vmatmul.mubr.f32.gmra.mrb[0].mxu0 %v634
      %v771 = vpop.f32.mrb[0].mxu0
      %v772 = vadd.f32 0.0, %v771
      %v773 = vpop.f32.mrb[0].mxu0
      %774 = vmatprep.mubr.f32.mxu0 0.0
      %775 = vmatmul.mubr.f32.gmra.mrb[0].mxu0 %v637
      %v776 = vpop.f32.mrb[0].mxu0
      %v777 = vadd.f32 0.0, %v776
      %v778 = vpop.f32.mrb[0].mxu0
      %779 = vmatprep.mubr.f32.mxu0 0.0
      %780 = vmatmul.mubr.f32.gmra.mrb[0].mxu0 %v640
      %v781 = vpop.f32.mrb[0].mxu0
      %v782 = vadd.f32 0.0, %v781
      %v783 = vpop.f32.mrb[0].mxu0
      %784 = vmatprep.mubr.f32.mxu0 0.0
      %785 = vmatmul.mubr.f32.gmra.mrb[0].mxu0 %v643
      %v786 = vpop.f32.mrb[0].mxu0
      %v787 = vadd.f32 0.0, %v786
      %v788 = vpop.f32.mrb[0].mxu0
      %789 = vdwg.mxu0
      %806 = vrot.lane.b32.xlu0 %v712, 16
      %v807 = vpop.permute.xlu0 %806
      %808 = vrot.lane.b32.xlu0 %v717, 16
      %v809 = vpop.permute.xlu0 %808
      %810 = vrot.lane.b32.xlu0 %v722, 16
      %v811 = vpop.permute.xlu0 %810
      %812 = vrot.lane.b32.xlu0 %v727, 16
      %v813 = vpop.permute.xlu0 %812
      %814 = vrot.lane.b32.xlu0 %v732, 16
      %v815 = vpop.permute.xlu0 %814
      %816 = vrot.lane.b32.xlu0 %v737, 16
      %v817 = vpop.permute.xlu0 %816
      %818 = vrot.lane.b32.xlu0 %v742, 16
      %v819 = vpop.permute.xlu0 %818
      %820 = vrot.lane.b32.xlu0 %v747, 16
      %v821 = vpop.permute.xlu0 %820
      %822 = vrot.lane.b32.xlu0 %v752, 16
      %v823 = vpop.permute.xlu0 %822
      %824 = vrot.lane.b32.xlu0 %v757, 16
      %v825 = vpop.permute.xlu0 %824
      %826 = vrot.lane.b32.xlu0 %v762, 16
      %v827 = vpop.permute.xlu0 %826
      %828 = vrot.lane.b32.xlu0 %v767, 16
      %v829 = vpop.permute.xlu0 %828
      %830 = vrot.lane.b32.xlu0 %v772, 16
      %v831 = vpop.permute.xlu0 %830
      %832 = vrot.lane.b32.xlu0 %v777, 16
      %v833 = vpop.permute.xlu0 %832
      %834 = vrot.lane.b32.xlu0 %v782, 16
      %v835 = vpop.permute.xlu0 %834
      %836 = vrot.lane.b32.xlu0 %v787, 16
      %v837 = vpop.permute.xlu0 %836
      %vm854 = vcmask 130048
      %v855 = vsel %vm854, %v494, %v807
      %v856 = vsel %vm854, %v499, %v809
      %v857 = vsel %vm854, %v504, %v811
      %v858 = vsel %vm854, %v509, %v813
      %v859 = vsel %vm854, %v514, %v815
      %v860 = vsel %vm854, %v519, %v817
      %v861 = vsel %vm854, %v524, %v819
      %v862 = vsel %vm854, %v529, %v821
      %v863 = vsel %vm854, %v534, %v823
      %v864 = vsel %vm854, %v539, %v825
      %v865 = vsel %vm854, %v544, %v827
      %v866 = vsel %vm854, %v549, %v829
      %v867 = vsel %vm854, %v554, %v831
      %v868 = vsel %vm854, %v559, %v833
      %v869 = vsel %vm854, %v564, %v835
      %v870 = vsel %vm854, %v569, %v837
      %v871 = vld [vmem:[%s4] sm:$0xff]
      %v872 = vld [vmem:[%s4 + $0x8] sm:$0xff]
      %v873 = vld [vmem:[%s4 + $0x10] sm:$0xff]
      %v874 = vld [vmem:[%s4 + $0x18] sm:$0xff]
      %vm875 = vcmask 261120
      %v877 = vsel %vm875, %v855, 0
      %v880 = vsel %vm875, %v856, 0
      %v883 = vsel %vm875, %v857, 0
      %v886 = vsel %vm875, %v858, 0
      %v889 = vsel %vm875, %v859, 0
      %v892 = vsel %vm875, %v860, 0
      %v895 = vsel %vm875, %v861, 0
      %v898 = vsel %vm875, %v862, 0
      %v901 = vsel %vm875, %v863, 0
      %v904 = vsel %vm875, %v864, 0
      %v907 = vsel %vm875, %v865, 0
      %v910 = vsel %vm875, %v866, 0
      %v913 = vsel %vm875, %v867, 0
      %v916 = vsel %vm875, %v868, 0
      %v919 = vsel %vm875, %v869, 0
      %v922 = vsel %vm875, %v870, 0
      %924 = vmatprep.subr.mxu0 0.0
      %925 = vmatpush1.msra.mxu0 %v871
      %926 = vmatprep.subr.mxu0 0.0
      %927 = vmatpush1.msra.mxu0 %v872
      %928 = vmatprep.subr.mxu0 0.0
      %929 = vmatpush1.msra.mxu0 %v873
      %930 = vmatprep.subr.mxu0 0.0
      %931 = vmatpush1.msra.mxu0 %v874
      %932 = vmatprep.subr.mxu0 0.0
      %933 = vmatpush1.msra.mxu0 0.0
      %934 = vmatprep.subr.mxu0 0.0
      %935 = vmatpush1.msra.mxu0 0.0
      %936 = vmatprep.subr.mxu0 0.0
      %937 = vmatpush1.msra.mxu0 0.0
      %938 = vmatprep.subr.mxu0 0.0
      %939 = vmatpush1.msra.mxu0 0.0
      %940 = vmatprep.subr.mxu0 0.0
      %941 = vmatpush1.msra.mxu0 0.0
      %942 = vmatprep.subr.mxu0 0.0
      %943 = vmatpush1.msra.mxu0 0.0
      %944 = vmatprep.subr.mxu0 0.0
      %945 = vmatpush1.msra.mxu0 0.0
      %946 = vmatprep.subr.mxu0 0.0
      %947 = vmatpush1.msra.mxu0 0.0
      %948 = vmatprep.subr.mxu0 0.0
      %949 = vmatpush1.msra.mxu0 0.0
      %950 = vmatprep.subr.mxu0 0.0
      %951 = vmatpush1.msra.mxu0 0.0
      %952 = vmatprep.subr.mxu0 0.0
      %953 = vmatpush1.msra.mxu0 0.0
      %954 = vmatprep.subr.mxu0 0.0
      %955 = vmatpush1.msra.mxu0 0.0
      %956 = vmatprep.subr.mxu0 0.0
      %957 = vmatpush1.msra.mxu0 0.0
      %958 = vmatprep.subr.mxu0 0.0
      %959 = vmatpush1.msra.mxu0 0.0
      %960 = vmatprep.subr.mxu0 0.0
      %961 = vmatpush1.msra.mxu0 0.0
      %962 = vmatprep.subr.mxu0 0.0
      %963 = vmatpush1.msra.mxu0 0.0
      %964 = vmatprep.subr.mxu0 0.0
      %965 = vmatpush1.msra.mxu0 0.0
      %966 = vmatprep.subr.mxu0 0.0
      %967 = vmatpush1.msra.mxu0 0.0
      %968 = vmatprep.subr.mxu0 0.0
      %969 = vmatpush1.msra.mxu0 0.0
      %970 = vmatprep.subr.mxu0 0.0
      %971 = vmatpush1.msra.mxu0 0.0
      %972 = vmatprep.subr.mxu0 0.0
      %973 = vmatpush1.msra.mxu0 0.0
      %974 = vmatprep.subr.mxu0 0.0
      %975 = vmatpush1.msra.mxu0 0.0
      %976 = vmatprep.subr.mxu0 0.0
      %977 = vmatpush1.msra.mxu0 0.0
      %978 = vmatprep.subr.mxu0 0.0
      %979 = vmatpush1.msra.mxu0 0.0
      %980 = vmatprep.subr.mxu0 0.0
      %981 = vmatpush1.msra.mxu0 0.0
      %982 = vmatprep.subr.mxu0 0.0
      %983 = vmatpush1.msra.mxu0 0.0
      %984 = vmatprep.subr.mxu0 0.0
      %985 = vmatpush1.msra.mxu0 0.0
      %986 = vmatprep.subr.mxu0 0.0
      %987 = vmatpush1.msra.mxu0 0.0
      %988 = vmatprep.mubr.f32.mxu0 0.0
      %989 = vmatmul.mubr.f32.gmra.mrb[0].mxu0 %v877
      %v990 = vpop.f32.mrb[0].mxu0
      %v991 = vadd.f32 0.0, %v990
      %v992 = vpop.f32.mrb[0].mxu0
      %993 = vmatprep.mubr.f32.mxu0 0.0
      %994 = vmatmul.mubr.f32.gmra.mrb[0].mxu0 %v880
      %v995 = vpop.f32.mrb[0].mxu0
      %v996 = vadd.f32 0.0, %v995
      %v997 = vpop.f32.mrb[0].mxu0
      %998 = vmatprep.mubr.f32.mxu0 0.0
      %999 = vmatmul.mubr.f32.gmra.mrb[0].mxu0 %v883
      %v1000 = vpop.f32.mrb[0].mxu0
      %v1001 = vadd.f32 0.0, %v1000
      %v1002 = vpop.f32.mrb[0].mxu0
      %1003 = vmatprep.mubr.f32.mxu0 0.0
      %1004 = vmatmul.mubr.f32.gmra.mrb[0].mxu0 %v886
      %v1005 = vpop.f32.mrb[0].mxu0
      %v1006 = vadd.f32 0.0, %v1005
      %v1007 = vpop.f32.mrb[0].mxu0
      %1008 = vmatprep.mubr.f32.mxu0 0.0
      %1009 = vmatmul.mubr.f32.gmra.mrb[0].mxu0 %v889
      %v1010 = vpop.f32.mrb[0].mxu0
      %v1011 = vadd.f32 0.0, %v1010
      %v1012 = vpop.f32.mrb[0].mxu0
      %1013 = vmatprep.mubr.f32.mxu0 0.0
      %1014 = vmatmul.mubr.f32.gmra.mrb[0].mxu0 %v892
      %v1015 = vpop.f32.mrb[0].mxu0
      %v1016 = vadd.f32 0.0, %v1015
      %v1017 = vpop.f32.mrb[0].mxu0
      %1018 = vmatprep.mubr.f32.mxu0 0.0
      %1019 = vmatmul.mubr.f32.gmra.mrb[0].mxu0 %v895
      %v1020 = vpop.f32.mrb[0].mxu0
      %v1021 = vadd.f32 0.0, %v1020
      %v1022 = vpop.f32.mrb[0].mxu0
      %1023 = vmatprep.mubr.f32.mxu0 0.0
      %1024 = vmatmul.mubr.f32.gmra.mrb[0].mxu0 %v898
      %v1025 = vpop.f32.mrb[0].mxu0
      %v1026 = vadd.f32 0.0, %v1025
      %v1027 = vpop.f32.mrb[0].mxu0
      %1028 = vmatprep.mubr.f32.mxu0 0.0
      %1029 = vmatmul.mubr.f32.gmra.mrb[0].mxu0 %v901
      %v1030 = vpop.f32.mrb[0].mxu0
      %v1031 = vadd.f32 0.0, %v1030
      %v1032 = vpop.f32.mrb[0].mxu0
      %1033 = vmatprep.mubr.f32.mxu0 0.0
      %1034 = vmatmul.mubr.f32.gmra.mrb[0].mxu0 %v904
      %v1035 = vpop.f32.mrb[0].mxu0
      %v1036 = vadd.f32 0.0, %v1035
      %v1037 = vpop.f32.mrb[0].mxu0
      %1038 = vmatprep.mubr.f32.mxu0 0.0
      %1039 = vmatmul.mubr.f32.gmra.mrb[0].mxu0 %v907
      %v1040 = vpop.f32.mrb[0].mxu0
      %v1041 = vadd.f32 0.0, %v1040
      %v1042 = vpop.f32.mrb[0].mxu0
      %1043 = vmatprep.mubr.f32.mxu0 0.0
      %1044 = vmatmul.mubr.f32.gmra.mrb[0].mxu0 %v910
      %v1045 = vpop.f32.mrb[0].mxu0
      %v1046 = vadd.f32 0.0, %v1045
      %v1047 = vpop.f32.mrb[0].mxu0
      %1048 = vmatprep.mubr.f32.mxu0 0.0
      %1049 = vmatmul.mubr.f32.gmra.mrb[0].mxu0 %v913
      %v1050 = vpop.f32.mrb[0].mxu0
      %v1051 = vadd.f32 0.0, %v1050
      %v1052 = vpop.f32.mrb[0].mxu0
      %1053 = vmatprep.mubr.f32.mxu0 0.0
      %1054 = vmatmul.mubr.f32.gmra.mrb[0].mxu0 %v916
      %v1055 = vpop.f32.mrb[0].mxu0
      %v1056 = vadd.f32 0.0, %v1055
      %v1057 = vpop.f32.mrb[0].mxu0
      %1058 = vmatprep.mubr.f32.mxu0 0.0
      %1059 = vmatmul.mubr.f32.gmra.mrb[0].mxu0 %v919
      %v1060 = vpop.f32.mrb[0].mxu0
      %v1061 = vadd.f32 0.0, %v1060
      %v1062 = vpop.f32.mrb[0].mxu0
      %1063 = vmatprep.mubr.f32.mxu0 0.0
      %1064 = vmatmul.mubr.f32.gmra.mrb[0].mxu0 %v922
      %v1065 = vpop.f32.mrb[0].mxu0
      %v1066 = vadd.f32 0.0, %v1065
      %v1067 = vpop.f32.mrb[0].mxu0
      %1068 = vdwg.mxu0
      %1069 = vst [vmem:[%s353] sm:$0xff] %v991
      %1070 = vst [vmem:[%s353 + $0x8] sm:$0xff] %v996
      %1071 = vst [vmem:[%s353 + $0x10] sm:$0xff] %v1001
      %1072 = vst [vmem:[%s353 + $0x18] sm:$0xff] %v1006
      %1073 = vst [vmem:[%s353 + $0x20] sm:$0xff] %v1011
      %1074 = vst [vmem:[%s353 + $0x28] sm:$0xff] %v1016
      %1075 = vst [vmem:[%s353 + $0x30] sm:$0xff] %v1021
      %1076 = vst [vmem:[%s353 + $0x38] sm:$0xff] %v1026
      %1077 = vst [vmem:[%s353 + $0x40] sm:$0xff] %v1031
      %1078 = vst [vmem:[%s353 + $0x48] sm:$0xff] %v1036
      %1079 = vst [vmem:[%s353 + $0x50] sm:$0xff] %v1041
      %1080 = vst [vmem:[%s353 + $0x58] sm:$0xff] %v1046
      %1081 = vst [vmem:[%s353 + $0x60] sm:$0xff] %v1051
      %1082 = vst [vmem:[%s353 + $0x68] sm:$0xff] %v1056
      %1083 = vst [vmem:[%s353 + $0x70] sm:$0xff] %v1061
      %1084 = vst [vmem:[%s353 + $0x78] sm:$0xff] %v1066
      %v1085 = vadd.f32 %v991, %v996
      %v1086 = vadd.f32 %v1085, %v1001
      %v1087 = vadd.f32 %v1086, %v1006
      %v1088 = vadd.f32 %v1087, %v1011
      %v1089 = vadd.f32 %v1088, %v1016
      %v1090 = vadd.f32 %v1089, %v1021
      %v1091 = vadd.f32 %v1090, %v1026
      %v1092 = vadd.f32 %v1091, %v1031
      %v1093 = vadd.f32 %v1092, %v1036
      %v1094 = vadd.f32 %v1093, %v1041
      %v1095 = vadd.f32 %v1094, %v1046
      %v1096 = vadd.f32 %v1095, %v1051
      %v1097 = vadd.f32 %v1096, %v1056
      %v1098 = vadd.f32 %v1097, %v1061
      %v1099 = vadd.f32 %v1098, %v1066
      %v1100 = vrot.slane %v1099, 4
      %v1101 = vadd.f32 %v1099, %v1100
      %v1102 = vrot.slane %v1101, 2
      %v1103 = vadd.f32 %v1101, %v1102
      %v1104 = vrot.slane %v1103, 1
      %v1105 = vadd.f32 %v1103, %v1104
      %1106 = vst [vmem:[%s362] sm:$0x1] %v1105
      %v1107 = vmul.f32 %v991, %v991
      %v1108 = vmul.f32 %v996, %v996
      %v1109 = vmul.f32 %v1001, %v1001
      %v1110 = vmul.f32 %v1006, %v1006
      %v1111 = vmul.f32 %v1011, %v1011
      %v1112 = vmul.f32 %v1016, %v1016
      %v1113 = vmul.f32 %v1021, %v1021
      %v1114 = vmul.f32 %v1026, %v1026
      %v1115 = vmul.f32 %v1031, %v1031
      %v1116 = vmul.f32 %v1036, %v1036
      %v1117 = vmul.f32 %v1041, %v1041
      %v1118 = vmul.f32 %v1046, %v1046
      %v1119 = vmul.f32 %v1051, %v1051
      %v1120 = vmul.f32 %v1056, %v1056
      %v1121 = vmul.f32 %v1061, %v1061
      %v1122 = vmul.f32 %v1066, %v1066
      %v1123 = vadd.f32 %v1107, %v1108
      %v1124 = vadd.f32 %v1123, %v1109
      %v1125 = vadd.f32 %v1124, %v1110
      %v1126 = vadd.f32 %v1125, %v1111
      %v1127 = vadd.f32 %v1126, %v1112
      %v1128 = vadd.f32 %v1127, %v1113
      %v1129 = vadd.f32 %v1128, %v1114
      %v1130 = vadd.f32 %v1129, %v1115
      %v1131 = vadd.f32 %v1130, %v1116
      %v1132 = vadd.f32 %v1131, %v1117
      %v1133 = vadd.f32 %v1132, %v1118
      %v1134 = vadd.f32 %v1133, %v1119
      %v1135 = vadd.f32 %v1134, %v1120
      %v1136 = vadd.f32 %v1135, %v1121
      %v1137 = vadd.f32 %v1136, %v1122
      %v1138 = vrot.slane %v1137, 4
      %v1139 = vadd.f32 %v1137, %v1138
      %v1140 = vrot.slane %v1139, 2
      %v1141 = vadd.f32 %v1139, %v1140
      %v1142 = vrot.slane %v1141, 1
      %v1143 = vadd.f32 %v1141, %v1142
      %1144 = vst [vmem:[%s362 + $0x1] sm:$0x1] %v1143
      %s1145 = smul.u32 16, %s23
      %p1146 = scmp.lt.s32.totalorder %s22, 1
      %s1147 = scalar_select %p1146, %s22, 1
      %p1148 = scmp.lt.s32.totalorder %s1145, 31
      %s1149 = scalar_select %p1148, %s1145, 31
      %s1150 = smul.addr %s1147, 32
      %s1151 = sadd.s32 %s1149, %s1150
      %s1152 = smul.addr %s1151, 8
      %s1153 = scalar_lea.vmem %s5, %s1152
      %p1154 = scmp.lt.s32.totalorder %s22, 1
      %s1155 = scalar_select %p1154, %s22, 1
      %p1156 = scmp.lt.s32.totalorder %s23, 1
      %s1157 = scalar_select %p1156, %s23, 1
      %s1158 = smul.addr %s1155, 2
      %s1159 = sadd.s32 %s1157, %s1158
      %s1160 = smul.addr %s1159, 2
      %s1161 = scalar_lea.vmem %s6, %s1160
      // Predicated region
      $region41: #{adaptor_forward.2} parent=39 // pred_check
        %p1162 = pneg %p175
      $region42: #{adaptor_forward.2} parent=39 // pred_check_branch
        %1164 = sbr.rel (%p1162) target = $region44
      $region43: #{adaptor_forward.2} parent=39 // pred_region
        %s1165 = smul.u32 16, %s23
      $region44: #{adaptor_forward.2} parent=39 // pred_fallthru
        _
      // Predicated region
      $region45: #{adaptor_forward.2} parent=39 // pred_check
        %p1166 = pneg %p203
      $region46: #{adaptor_forward.2} parent=39 // pred_check_branch
        %1168 = sbr.rel (%p1166) target = $region48
      $region47: #{adaptor_forward.2} parent=39 // pred_region
        _
      $region48: #{adaptor_forward.2} parent=39 // pred_fallthru
        _
    $region40: #{adaptor_forward.2} parent=5 // pred_fallthru
      _
    %p1169 = scmp.le.s32.totalorder 2, %s13
    // Predicated region
    $region49: #{adaptor_forward.2} parent=5 // pred_check
      %p1170 = pneg %p1169
    $region50: #{adaptor_forward.2} parent=5 // pred_check_branch
      %1172 = sbr.rel (%p1170) target = $region52
    $region51: #{adaptor_forward.2} parent=5 // pred_region
      %s1173 = ssub.s32 %s13, 2
      // Predicated region
      $region53: #{adaptor_forward.2} parent=51 // pred_check
        %p1174 = pneg %p181
      $region54: #{adaptor_forward.2} parent=51 // pred_check_branch
        %1176 = sbr.rel (%p1174) target = $region56
      $region55: #{adaptor_forward.2} parent=51 // pred_region
        %s1177 = smul.u32 16, %s25
        %p1178 = scmp.lt.s32.totalorder %s24, 1
        %s1179 = scalar_select %p1178, %s24, 1
        %p1180 = scmp.lt.s32.totalorder %s1177, 31
        %s1181 = scalar_select %p1180, %s1177, 31
        %s1182 = smul.addr %s1179, 32
        %s1183 = sadd.s32 %s1181, %s1182
        %s1184 = smul.addr %s1183, 8
        %s1185 = scalar_lea.vmem %s5, %s1184
      $region56: #{adaptor_forward.2} parent=51 // pred_fallthru
        _
      // Predicated region
      $region57: #{adaptor_forward.2} parent=51 // pred_check
        %p1186 = pneg %p209
      $region58: #{adaptor_forward.2} parent=51 // pred_check_branch
        %1188 = sbr.rel (%p1186) target = $region60
      $region59: #{adaptor_forward.2} parent=51 // pred_region
        %p1189 = scmp.lt.s32.totalorder %s24, 1
        %s1190 = scalar_select %p1189, %s24, 1
        %p1191 = scmp.lt.s32.totalorder %s25, 1
        %s1192 = scalar_select %p1191, %s25, 1
        %s1193 = smul.addr %s1190, 2
        %s1194 = sadd.s32 %s1192, %s1193
        %s1195 = smul.addr %s1194, 2
        %s1196 = scalar_lea.vmem %s6, %s1195
      $region60: #{adaptor_forward.2} parent=51 // pred_fallthru
        _
    $region52: #{adaptor_forward.2} parent=5 // pred_fallthru
      _
  $region6: #{adaptor_forward.2} parent=0 // loop_footer
    %s17 = sadd.s32 1, %s13
  $region7: #{adaptor_forward.2} parent=0 // loop_footer_branch
    %12 = sbr.rel target = $region3
  $region8: #{adaptor_forward.2} parent=0 // loop_exit
    _

</llo_original>
